<compile_context>
chip_gen: v5e
topology: v5e:2x2
jax: 0.10.0
libtpu: 0.0.40
codegen_flags: <defaults>
</compile_context>

<pallas_src>
import jax
import jax.numpy as jnp
from jax.experimental import pallas as pl
from jax.experimental.pallas import tpu as pltpu


def resblock_kernel(x_ref, sc1_ref, sh1_ref, sc2_ref, sh2_ref,
                    pproj_ref, bproj_ref, wcat1_ref, bc1_ref, wcat2_ref, bc2_ref,
                    out_ref):
    B, H, WCin = x_ref.shape
    WCout = out_ref.shape[2]
    BH = B * H

    x3 = x_ref[...]                                   # (B, H, W*Cin) f32, lane-packed channels
    x2 = x3.reshape(BH, WCin)

    # per-image row-boundary masks for the ky=0 / ky=2 conv taps (BH packs B images of H rows)
    row = jax.lax.broadcasted_iota(jnp.int32, (BH, 1), 0)
    is_top = (row % H) == 0               # the "row above" is outside this image -> zero
    is_bot = (row % H) == (H - 1)         # the "row below" is outside this image -> zero

    # ---- residual: Conv1x1 as block-diagonal lane-packed matmul (bf16 in, f32 acc) ----------
    r = jnp.dot(x2.astype(jnp.bfloat16), pproj_ref[...],
                preferred_element_type=jnp.float32) + bproj_ref[...]

    # ---- AdaGroupNorm (num_groups == 1, biased var, eps=1e-5) + SiLU, all f32 ----------------
    def ada_gn_silu(h3, sc_ref, sh_ref):
        n = float(h3.shape[1] * h3.shape[2])
        s1 = jnp.sum(h3, axis=2, keepdims=True)       # lane reduce
        s1 = jnp.sum(s1, axis=1, keepdims=True)       # sublane reduce -> (B,1,1)
        s2 = jnp.sum(h3 * h3, axis=2, keepdims=True)
        s2 = jnp.sum(s2, axis=1, keepdims=True)
        mu = s1 / n
        var = s2 / n - mu * mu                        # single-pass biased variance
        hn = (h3 - mu) * jax.lax.rsqrt(var + 1e-5)
        h = hn * sc_ref[...] + sh_ref[...]            # sc already holds (1 + scale); (B,1,WC)
        return h * jax.nn.sigmoid(h)                  # SiLU

    # ---- Conv3x3 (padding=1): kx taps folded into band weights, ky taps via sublane rolls ---
    def conv3x3(h2, wcat_ref, bias_ref):
        WC = h2.shape[1]
        up = jnp.where(is_top, 0.0, pltpu.roll(h2, 1, axis=0))        # up[y]  = h[y-1]
        dn = jnp.where(is_bot, 0.0, pltpu.roll(h2, BH - 1, axis=0))   # dn[y]  = h[y+1]
        if WC % 128 == 0:
            # lane-aligned pieces -> K-fused single matmul (K = 3*WC)
            h_cat = jnp.concatenate([up, h2, dn], axis=-1).astype(jnp.bfloat16)
            acc = jnp.dot(h_cat, wcat_ref[...], preferred_element_type=jnp.float32)
        else:
            # 64-lane bands: three accumulating matmuls (avoid unaligned lane concat)
            acc = jnp.dot(h2.astype(jnp.bfloat16), wcat_ref[pl.ds(WC, WC), :],
                          preferred_element_type=jnp.float32)
            acc += jnp.dot(up.astype(jnp.bfloat16), wcat_ref[pl.ds(0, WC), :],
                           preferred_element_type=jnp.float32)
            acc += jnp.dot(dn.astype(jnp.bfloat16), wcat_ref[pl.ds(2 * WC, WC), :],
                           preferred_element_type=jnp.float32)
        return acc + bias_ref[...]

    # ---- forward -----------------------------------------------------------------------------
    h = ada_gn_silu(x3, sc1_ref, sh1_ref)                          # (B, H, W*Cin)
    h = conv3x3(h.reshape(BH, WCin), wcat1_ref, bc1_ref)           # (BH, W*Cout)
    h = ada_gn_silu(h.reshape(B, H, WCout), sc2_ref, sh2_ref)      # (B, H, W*Cout)
    h = conv3x3(h.reshape(BH, WCout), wcat2_ref, bc2_ref)          # (BH, W*Cout)
    # self.attn == nn.Identity()  (attn=False)
    out_ref[...] = (h + r).reshape(B, H, WCout)                    # lane-dense (B, H, W*Cout)


def _band_weights_cat(w_oihw, W):
    """3x3 conv -> (3*W*Cin, W*Cout): kx taps + x padding folded per-ky band, ky bands along K."""
    Cout, Cin = w_oihw.shape[0], w_oihw.shape[1]
    w = jnp.transpose(w_oihw, (2, 3, 1, 0))                        # (ky, kx, Cin, Cout)
    xs = jnp.arange(W)
    bands = []
    for ky in range(3):
        band = jnp.zeros((W, Cin, W, Cout), w.dtype)
        for kx in range(3):
            # output pixel xo reads input pixel xi = xo + kx - 1 (zero outside [0, W))
            oh = (xs[:, None] == xs[None, :] + (kx - 1)).astype(w.dtype)   # (W_in, W_out)
            band = band + oh[:, None, :, None] * w[ky, kx][None, :, None, :]
        bands.append(band.reshape(W * Cin, W * Cout))
    return jnp.concatenate(bands, axis=0)                          # K order: [up, mid, dn]


def _pick_batch_block(n, h, m_target=256):
    """Largest divisor b of n with b*h <= m_target; prefer >=2 grid steps if M stays >= 128."""
    divs = [b for b in range(1, n + 1) if n % b == 0]
    fit = [b for b in divs if b * h <= m_target] or [1]
    best = max(fit)
    if n // best < 2:
        alt = [b for b in fit if n // b >= 2 and b * h >= 128]
        if alt:
            best = max(alt)
    return best


@jax.jit
def res_block_forward(x_nchw, cond, params):
    """ResBlock forward. x_nchw: (N, Cin, H, W), cond: (N, Ccond) -> (N, Cout, H, W)."""
    N, Cin, H, W = x_nchw.shape
    Cout = params["wc1"].shape[0]
    # group-norm path hardcodes num_groups == 1 (valid while C < 64, i.e. max(1, C//32) == 1)
    assert max(1, Cin // 32) == 1 and max(1, Cout // 32) == 1

    # On v5e prefer m_target=128 (128-wide MXU); 256 fills v6e/v7x.
    B_blk = _pick_batch_block(N, H, m_target=256)

    # lane-packed input: (N, H, W*Cin), channels fastest within a pixel.
    # (If embedded in a larger model, keep this packed layout between layers and drop the
    #  NCHW<->packed transposes at the boundary.)
    x = jnp.transpose(x_nchw, (0, 2, 3, 1)).reshape(N, H, W * Cin)

    # AdaGroupNorm scale/shift precomputed (one batched matmul); (1 + scale) hoisted; lane-tiled
    ss1 = cond @ params["wl1"].T + params["bl1"]                   # (N, 2*Cin)
    sc1 = jnp.tile(1.0 + ss1[:, :Cin], (1, W)).reshape(N, 1, W * Cin)
    sh1 = jnp.tile(ss1[:, Cin:], (1, W)).reshape(N, 1, W * Cin)
    ss2 = cond @ params["wl2"].T + params["bl2"]                   # (N, 2*Cout)
    sc2 = jnp.tile(1.0 + ss2[:, :Cout], (1, W)).reshape(N, 1, W * Cout)
    sh2 = jnp.tile(ss2[:, Cout:], (1, W)).reshape(N, 1, W * Cout)

    # Conv1x1 projection as a block-diagonal (W*Cin, W*Cout) matrix; matmul operands in bf16
    pproj = jnp.kron(jnp.eye(W, dtype=jnp.float32),
                     jnp.transpose(params["wproj"][:, :, 0, 0])).astype(jnp.bfloat16)
    bproj = jnp.tile(params["bproj"], W)[None, :]                  # (1, W*Cout) f32
    wcat1 = _band_weights_cat(params["wc1"], W).astype(jnp.bfloat16)   # (3*W*Cin,  W*Cout)
    bc1 = jnp.tile(params["bc1"], W)[None, :]
    wcat2 = _band_weights_cat(params["wc2"], W).astype(jnp.bfloat16)   # (3*W*Cout, W*Cout)
    bc2 = jnp.tile(params["bc2"], W)[None, :]

    def fixed(arr):
        nd = arr.ndim
        return pl.BlockSpec(arr.shape, lambda b, _nd=nd: (0,) * _nd)

    out = pl.pallas_call(
        resblock_kernel,
        out_shape=jax.ShapeDtypeStruct((N, H, W * Cout), jnp.float32),
        grid_spec=pltpu.PrefetchScalarGridSpec(
            num_scalar_prefetch=0,
            grid=(N // B_blk,),
            in_specs=[
                pl.BlockSpec((B_blk, H, W * Cin), lambda b: (b, 0, 0)),
                pl.BlockSpec((B_blk, 1, W * Cin), lambda b: (b, 0, 0)),
                pl.BlockSpec((B_blk, 1, W * Cin), lambda b: (b, 0, 0)),
                pl.BlockSpec((B_blk, 1, W * Cout), lambda b: (b, 0, 0)),
                pl.BlockSpec((B_blk, 1, W * Cout), lambda b: (b, 0, 0)),
                fixed(pproj), fixed(bproj),
                fixed(wcat1), fixed(bc1),
                fixed(wcat2), fixed(bc2),
            ],
            out_specs=pl.BlockSpec((B_blk, H, W * Cout), lambda b: (b, 0, 0)),
        ),
        compiler_params=pltpu.CompilerParams(dimension_semantics=("parallel",)),
    )(x, sc1, sh1, sc2, sh2, pproj, bproj, wcat1, bc1, wcat2, bc2)

    out = out.reshape(N, H, W, Cout)
    return jnp.transpose(out, (0, 3, 1, 2))                        # NHWC -> NCHW


# ---------------- pure-JAX f32 reference (NCHW, mirrors the PyTorch module) ----------------
def ref_forward(x, cond, p):
    def ada_gn(h, wl, bl):
        c = h.shape[1]
        mu = jnp.mean(h, axis=(1, 2, 3), keepdims=True)            # num_groups == 1
        var = jnp.mean((h - mu) ** 2, axis=(1, 2, 3), keepdims=True)
        hn = (h - mu) / jnp.sqrt(var + 1e-5)
        ss = cond @ wl.T + bl                                      # nn.Linear
        scale = ss[:, :c][:, :, None, None]
        shift = ss[:, c:][:, :, None, None]
        return hn * (1.0 + scale) + shift

    def silu(h):
        return h * jax.nn.sigmoid(h)

    def conv3x3(h, w, b):
        y = jax.lax.conv_general_dilated(h, w, (1, 1), ((1, 1), (1, 1)),
                                         dimension_numbers=("NCHW", "OIHW", "NCHW"))
        return y + b[None, :, None, None]

    def conv1x1(h, w_oihw, b):
        y = jnp.einsum("nchw,oc->nohw", h, w_oihw[:, :, 0, 0])
        return y + b[None, :, None, None]

    r = conv1x1(x, p["wproj"], p["bproj"])
    h = conv3x3(silu(ada_gn(x, p["wl1"], p["bl1"])), p["wc1"], p["bc1"])
    h = conv3x3(silu(ada_gn(h, p["wl2"], p["bl2"])), p["wc2"], p["bc2"])
    return h + r                                                   # attn == Identity


if __name__ == "__main__":
    N, Cin, Cout, Ccond, H, W = 2, 4, 8, 16, 16, 16
    key = jax.random.PRNGKey(0)
    ks = jax.random.split(key, 12)

    def init(k, shape, scale=0.1):
        return scale * jax.random.normal(k, shape, jnp.float32)

    x = jax.random.normal(ks[0], (N, Cin, H, W), jnp.float32)
    cond = jax.random.normal(ks[1], (N, Ccond), jnp.float32)

    params = {
        # proj = Conv1x1(in, out)
        "wproj": init(ks[2], (Cout, Cin, 1, 1)),
        "bproj": init(ks[3], (Cout,)),
        # norm1.linear = Linear(cond, 2*in)
        "wl1": init(ks[4], (2 * Cin, Ccond)),
        "bl1": init(ks[5], (2 * Cin,)),
        # conv1 = Conv3x3(in, out)
        "wc1": init(ks[6], (Cout, Cin, 3, 3)),
        "bc1": init(ks[7], (Cout,)),
        # norm2.linear = Linear(cond, 2*out)
        "wl2": init(ks[8], (2 * Cout, Ccond)),
        "bl2": init(ks[9], (2 * Cout,)),
        # conv2 = Conv3x3(out, out); nn.init.zeros_(conv2.weight)
        "wc2": jnp.zeros((Cout, Cout, 3, 3), jnp.float32),
        "bc2": init(ks[10], (Cout,)),
    }

    def check(p, tag):
        out = jax.block_until_ready(res_block_forward(x, cond, p))
        assert out.shape == (N, Cout, H, W), out.shape
        ref = ref_forward(x, cond, p)
        # bf16 MXU operands (f32 accumulation) -> slightly looser tolerance than pure f32
        if not bool(jnp.allclose(out, ref, rtol=2e-2, atol=2e-2)):
            raise RuntimeError(
                f"[{tag}] mismatch vs reference, max|diff|={float(jnp.max(jnp.abs(out - ref)))}")

    # 1) module-faithful params (conv2 weight zero-initialized, as in the PyTorch module)
    check(params, "zero-init conv2")
    # 2) re-validate the conv2 path with a nonzero weight (otherwise wb2/roll errors are hidden)
    params_nz = dict(params, wc2=init(ks[11], (Cout, Cout, 3, 3)))
    check(params_nz, "nonzero conv2")

    print("KERNEL_OK")
</pallas_src>

<mosaic_0001>
module attributes {stable_mosaic.version = 11 : i64} {
  func.func @resblock_kernel(%arg0: i32, %arg1: memref<2x16x64xf32, #tpu.memory_space<vmem>>, %arg2: memref<2x1x64xf32, #tpu.memory_space<vmem>>, %arg3: memref<2x1x64xf32, #tpu.memory_space<vmem>>, %arg4: memref<2x1x128xf32, #tpu.memory_space<vmem>>, %arg5: memref<2x1x128xf32, #tpu.memory_space<vmem>>, %arg6: memref<64x128xbf16, #tpu.memory_space<vmem>>, %arg7: memref<1x128xf32, #tpu.memory_space<vmem>>, %arg8: memref<192x128xbf16, #tpu.memory_space<vmem>>, %arg9: memref<1x128xf32, #tpu.memory_space<vmem>>, %arg10: memref<384x128xbf16, #tpu.memory_space<vmem>>, %arg11: memref<1x128xf32, #tpu.memory_space<vmem>>, %arg12: memref<2x16x128xf32, #tpu.memory_space<vmem>>) attributes {dimension_semantics = [#tpu.dimension_semantics<parallel>], iteration_bounds = array<i64: 1>, scalar_prefetch = 0 : i64, scratch_operands = 0 : i64, tpu.core_type = #tpu.core_type<tc>, window_params = [{transform_indices = @transform_0, window_bounds = array<i64: 2, 16, 64>}, {transform_indices = @transform_1, window_bounds = array<i64: 2, 1, 64>}, {transform_indices = @transform_2, window_bounds = array<i64: 2, 1, 64>}, {transform_indices = @transform_3, window_bounds = array<i64: 2, 1, 128>}, {transform_indices = @transform_4, window_bounds = array<i64: 2, 1, 128>}, {pipeline_mode = #tpu.pipeline_mode<synchronous>, transform_indices = @transform_5, window_bounds = array<i64: 64, 128>}, {pipeline_mode = #tpu.pipeline_mode<synchronous>, transform_indices = @transform_6, window_bounds = array<i64: 1, 128>}, {pipeline_mode = #tpu.pipeline_mode<synchronous>, transform_indices = @transform_7, window_bounds = array<i64: 192, 128>}, {pipeline_mode = #tpu.pipeline_mode<synchronous>, transform_indices = @transform_8, window_bounds = array<i64: 1, 128>}, {pipeline_mode = #tpu.pipeline_mode<synchronous>, transform_indices = @transform_9, window_bounds = array<i64: 384, 128>}, {pipeline_mode = #tpu.pipeline_mode<synchronous>, transform_indices = @transform_10, window_bounds = array<i64: 1, 128>}, {transform_indices = @transform_11, window_bounds = array<i64: 2, 16, 128>}]} {
    %c0 = arith.constant 0 : index
    %c0_0 = arith.constant 0 : index
    %c0_1 = arith.constant 0 : index
    %0 = vector.load %arg1[%c0, %c0_0, %c0_1] : memref<2x16x64xf32, #tpu.memory_space<vmem>>, vector<2x16x64xf32>
    %1 = vector.shape_cast %0 : vector<2x16x64xf32> to vector<32x64xf32>
    %2 = tpu.iota {dimensions = array<i32: 0>} : vector<32x1xi32>
    %c16_i32 = arith.constant 16 : i32
    %c0_i32 = arith.constant 0 : i32
    %3 = arith.cmpi eq, %c16_i32, %c0_i32 : i32
    %c1_i32 = arith.constant 1 : i32
    %4 = arith.select %3, %c1_i32, %c16_i32 : i32
    %5 = vector.broadcast %4 : i32 to vector<32x1xi32>
    %6 = arith.remsi %2, %5 : vector<32x1xi32>
    %c0_i32_2 = arith.constant 0 : i32
    %7 = vector.broadcast %c0_i32_2 : i32 to vector<32x1xi32>
    %8 = arith.cmpi ne, %6, %7 : vector<32x1xi32>
    %c0_i32_3 = arith.constant 0 : i32
    %9 = vector.broadcast %c0_i32_3 : i32 to vector<32x1xi32>
    %10 = arith.cmpi slt, %6, %9 : vector<32x1xi32>
    %c0_i32_4 = arith.constant 0 : i32
    %11 = arith.cmpi slt, %4, %c0_i32_4 : i32
    %12 = vector.broadcast %11 : i1 to vector<32x1xi1>
    %13 = vector.broadcast %12 : vector<32x1xi1> to vector<32x1xi1>
    %14 = arith.xori %10, %13 : vector<32x1xi1>
    %15 = arith.andi %14, %8 : vector<32x1xi1>
    %16 = vector.broadcast %4 : i32 to vector<32x1xi32>
    %17 = arith.addi %6, %16 : vector<32x1xi32>
    %18 = arith.select %15, %17, %6 : vector<32x1xi1>, vector<32x1xi32>
    %c0_i32_5 = arith.constant 0 : i32
    %19 = vector.broadcast %c0_i32_5 : i32 to vector<32x1xi32>
    %20 = arith.cmpi eq, %18, %19 : vector<32x1xi32>
    %c16_i32_6 = arith.constant 16 : i32
    %c0_i32_7 = arith.constant 0 : i32
    %21 = arith.cmpi eq, %c16_i32_6, %c0_i32_7 : i32
    %c1_i32_8 = arith.constant 1 : i32
    %22 = arith.select %21, %c1_i32_8, %c16_i32_6 : i32
    %23 = vector.broadcast %22 : i32 to vector<32x1xi32>
    %24 = arith.remsi %2, %23 : vector<32x1xi32>
    %c0_i32_9 = arith.constant 0 : i32
    %25 = vector.broadcast %c0_i32_9 : i32 to vector<32x1xi32>
    %26 = arith.cmpi ne, %24, %25 : vector<32x1xi32>
    %c0_i32_10 = arith.constant 0 : i32
    %27 = vector.broadcast %c0_i32_10 : i32 to vector<32x1xi32>
    %28 = arith.cmpi slt, %24, %27 : vector<32x1xi32>
    %c0_i32_11 = arith.constant 0 : i32
    %29 = arith.cmpi slt, %22, %c0_i32_11 : i32
    %30 = vector.broadcast %29 : i1 to vector<32x1xi1>
    %31 = vector.broadcast %30 : vector<32x1xi1> to vector<32x1xi1>
    %32 = arith.xori %28, %31 : vector<32x1xi1>
    %33 = arith.andi %32, %26 : vector<32x1xi1>
    %34 = vector.broadcast %22 : i32 to vector<32x1xi32>
    %35 = arith.addi %24, %34 : vector<32x1xi32>
    %36 = arith.select %33, %35, %24 : vector<32x1xi1>, vector<32x1xi32>
    %c15_i32 = arith.constant 15 : i32
    %37 = vector.broadcast %c15_i32 : i32 to vector<32x1xi32>
    %38 = arith.cmpi eq, %36, %37 : vector<32x1xi32>
    %39 = arith.truncf %1 : vector<32x64xf32> to vector<32x64xbf16>
    %c0_12 = arith.constant 0 : index
    %c0_13 = arith.constant 0 : index
    %40 = vector.load %arg6[%c0_12, %c0_13] : memref<64x128xbf16, #tpu.memory_space<vmem>>, vector<64x128xbf16>
    %cst = arith.constant dense<0.000000e+00> : vector<32x128xf32>
    %41 = tpu.matmul %39, %40, %cst {dimension_numbers = #tpu.dot_dimension_numbers<[1], [0], [0], [1], [0, 0, 1, 1], [], []>} : vector<32x64xbf16>, vector<64x128xbf16>, vector<32x128xf32> -> vector<32x128xf32>
    %c0_14 = arith.constant 0 : index
    %c0_15 = arith.constant 0 : index
    %42 = vector.load %arg7[%c0_14, %c0_15] : memref<1x128xf32, #tpu.memory_space<vmem>>, vector<1x128xf32>
    %43 = vector.broadcast %42 : vector<1x128xf32> to vector<32x128xf32>
    %44 = arith.addf %41, %43 : vector<32x128xf32>
    %cst_16 = arith.constant dense<0.000000e+00> : vector<2x16xf32>
    %45 = vector.multi_reduction <add>, %0, %cst_16 [2] : vector<2x16x64xf32> to vector<2x16xf32>
    %46 = vector.shape_cast %45 : vector<2x16xf32> to vector<2x16x1xf32>
    %cst_17 = arith.constant dense<0.000000e+00> : vector<2x1xf32>
    %47 = vector.multi_reduction <add>, %46, %cst_17 [1] : vector<2x16x1xf32> to vector<2x1xf32>
    %48 = vector.shape_cast %47 : vector<2x1xf32> to vector<2x1x1xf32>
    %49 = arith.mulf %0, %0 : vector<2x16x64xf32>
    %cst_18 = arith.constant dense<0.000000e+00> : vector<2x16xf32>
    %50 = vector.multi_reduction <add>, %49, %cst_18 [2] : vector<2x16x64xf32> to vector<2x16xf32>
    %51 = vector.shape_cast %50 : vector<2x16xf32> to vector<2x16x1xf32>
    %cst_19 = arith.constant dense<0.000000e+00> : vector<2x1xf32>
    %52 = vector.multi_reduction <add>, %51, %cst_19 [1] : vector<2x16x1xf32> to vector<2x1xf32>
    %53 = vector.shape_cast %52 : vector<2x1xf32> to vector<2x1x1xf32>
    %cst_20 = arith.constant 1.024000e+03 : f32
    %54 = vector.broadcast %cst_20 : f32 to vector<2x1x1xf32>
    %55 = arith.divf %48, %54 : vector<2x1x1xf32>
    %cst_21 = arith.constant 1.024000e+03 : f32
    %56 = vector.broadcast %cst_21 : f32 to vector<2x1x1xf32>
    %57 = arith.divf %53, %56 : vector<2x1x1xf32>
    %58 = arith.mulf %55, %55 : vector<2x1x1xf32>
    %59 = arith.subf %57, %58 : vector<2x1x1xf32>
    %60 = vector.broadcast %55 : vector<2x1x1xf32> to vector<2x16x64xf32>
    %61 = arith.subf %0, %60 : vector<2x16x64xf32>
    %cst_22 = arith.constant 9.99999974E-6 : f32
    %62 = vector.broadcast %cst_22 : f32 to vector<2x1x1xf32>
    %63 = arith.addf %59, %62 : vector<2x1x1xf32>
    %64 = math.rsqrt %63 : vector<2x1x1xf32>
    %65 = vector.broadcast %64 : vector<2x1x1xf32> to vector<2x16x64xf32>
    %66 = arith.mulf %61, %65 : vector<2x16x64xf32>
    %c0_23 = arith.constant 0 : index
    %c0_24 = arith.constant 0 : index
    %c0_25 = arith.constant 0 : index
    %67 = vector.load %arg2[%c0_23, %c0_24, %c0_25] : memref<2x1x64xf32, #tpu.memory_space<vmem>>, vector<2x1x64xf32>
    %68 = vector.broadcast %67 : vector<2x1x64xf32> to vector<2x16x64xf32>
    %69 = arith.mulf %66, %68 : vector<2x16x64xf32>
    %c0_26 = arith.constant 0 : index
    %c0_27 = arith.constant 0 : index
    %c0_28 = arith.constant 0 : index
    %70 = vector.load %arg3[%c0_26, %c0_27, %c0_28] : memref<2x1x64xf32, #tpu.memory_space<vmem>>, vector<2x1x64xf32>
    %71 = vector.broadcast %70 : vector<2x1x64xf32> to vector<2x16x64xf32>
    %72 = arith.addf %69, %71 : vector<2x16x64xf32>
    %73 = arith.negf %72 : vector<2x16x64xf32>
    %74 = math.exp %73 : vector<2x16x64xf32>
    %cst_29 = arith.constant 1.000000e+00 : f32
    %75 = vector.broadcast %cst_29 : f32 to vector<2x16x64xf32>
    %76 = arith.addf %75, %74 : vector<2x16x64xf32>
    %77 = arith.divf %75, %76 : vector<2x16x64xf32>
    %78 = arith.mulf %72, %77 : vector<2x16x64xf32>
    %79 = vector.shape_cast %78 : vector<2x16x64xf32> to vector<32x64xf32>
    %c1_i32_30 = arith.constant 1 : i32
    %80 = tpu.dynamic_rotate %79 by %c1_i32_30 dim 0 : vector<32x64xf32>, i32 -> vector<32x64xf32>
    %cst_31 = arith.constant 0.000000e+00 : f32
    %81 = vector.shape_cast %20 : vector<32x1xi1> to vector<32x1xi1>
    %82 = vector.broadcast %81 : vector<32x1xi1> to vector<32x64xi1>
    %83 = vector.broadcast %cst_31 : f32 to vector<32x64xf32>
    %84 = arith.select %82, %83, %80 : vector<32x64xi1>, vector<32x64xf32>
    %c31_i32 = arith.constant 31 : i32
    %85 = tpu.dynamic_rotate %79 by %c31_i32 dim 0 : vector<32x64xf32>, i32 -> vector<32x64xf32>
    %cst_32 = arith.constant 0.000000e+00 : f32
    %86 = vector.shape_cast %38 : vector<32x1xi1> to vector<32x1xi1>
    %87 = vector.broadcast %86 : vector<32x1xi1> to vector<32x64xi1>
    %88 = vector.broadcast %cst_32 : f32 to vector<32x64xf32>
    %89 = arith.select %87, %88, %85 : vector<32x64xi1>, vector<32x64xf32>
    %90 = arith.truncf %79 : vector<32x64xf32> to vector<32x64xbf16>
    %c64 = arith.constant 64 : index
    %c0_33 = arith.constant 0 : index
    %91 = vector.load %arg8[%c64, %c0_33] : memref<192x128xbf16, #tpu.memory_space<vmem>>, vector<64x128xbf16>
    %cst_34 = arith.constant dense<0.000000e+00> : vector<32x128xf32>
    %92 = tpu.matmul %90, %91, %cst_34 {dimension_numbers = #tpu.dot_dimension_numbers<[1], [0], [0], [1], [0, 0, 1, 1], [], []>} : vector<32x64xbf16>, vector<64x128xbf16>, vector<32x128xf32> -> vector<32x128xf32>
    %93 = arith.truncf %84 : vector<32x64xf32> to vector<32x64xbf16>
    %c0_35 = arith.constant 0 : index
    %c0_36 = arith.constant 0 : index
    %94 = vector.load %arg8[%c0_35, %c0_36] : memref<192x128xbf16, #tpu.memory_space<vmem>>, vector<64x128xbf16>
    %cst_37 = arith.constant dense<0.000000e+00> : vector<32x128xf32>
    %95 = tpu.matmul %93, %94, %cst_37 {dimension_numbers = #tpu.dot_dimension_numbers<[1], [0], [0], [1], [0, 0, 1, 1], [], []>} : vector<32x64xbf16>, vector<64x128xbf16>, vector<32x128xf32> -> vector<32x128xf32>
    %96 = arith.addf %92, %95 : vector<32x128xf32>
    %97 = arith.truncf %89 : vector<32x64xf32> to vector<32x64xbf16>
    %c128 = arith.constant 128 : index
    %c0_38 = arith.constant 0 : index
    %98 = vector.load %arg8[%c128, %c0_38] : memref<192x128xbf16, #tpu.memory_space<vmem>>, vector<64x128xbf16>
    %cst_39 = arith.constant dense<0.000000e+00> : vector<32x128xf32>
    %99 = tpu.matmul %97, %98, %cst_39 {dimension_numbers = #tpu.dot_dimension_numbers<[1], [0], [0], [1], [0, 0, 1, 1], [], []>} : vector<32x64xbf16>, vector<64x128xbf16>, vector<32x128xf32> -> vector<32x128xf32>
    %100 = arith.addf %96, %99 : vector<32x128xf32>
    %c0_40 = arith.constant 0 : index
    %c0_41 = arith.constant 0 : index
    %101 = vector.load %arg9[%c0_40, %c0_41] : memref<1x128xf32, #tpu.memory_space<vmem>>, vector<1x128xf32>
    %102 = vector.broadcast %101 : vector<1x128xf32> to vector<32x128xf32>
    %103 = arith.addf %100, %102 : vector<32x128xf32>
    %104 = vector.shape_cast %103 : vector<32x128xf32> to vector<2x16x128xf32>
    %cst_42 = arith.constant dense<0.000000e+00> : vector<2x16xf32>
    %105 = vector.multi_reduction <add>, %104, %cst_42 [2] : vector<2x16x128xf32> to vector<2x16xf32>
    %106 = vector.shape_cast %105 : vector<2x16xf32> to vector<2x16x1xf32>
    %cst_43 = arith.constant dense<0.000000e+00> : vector<2x1xf32>
    %107 = vector.multi_reduction <add>, %106, %cst_43 [1] : vector<2x16x1xf32> to vector<2x1xf32>
    %108 = vector.shape_cast %107 : vector<2x1xf32> to vector<2x1x1xf32>
    %109 = arith.mulf %104, %104 : vector<2x16x128xf32>
    %cst_44 = arith.constant dense<0.000000e+00> : vector<2x16xf32>
    %110 = vector.multi_reduction <add>, %109, %cst_44 [2] : vector<2x16x128xf32> to vector<2x16xf32>
    %111 = vector.shape_cast %110 : vector<2x16xf32> to vector<2x16x1xf32>
    %cst_45 = arith.constant dense<0.000000e+00> : vector<2x1xf32>
    %112 = vector.multi_reduction <add>, %111, %cst_45 [1] : vector<2x16x1xf32> to vector<2x1xf32>
    %113 = vector.shape_cast %112 : vector<2x1xf32> to vector<2x1x1xf32>
    %cst_46 = arith.constant 2.048000e+03 : f32
    %114 = vector.broadcast %cst_46 : f32 to vector<2x1x1xf32>
    %115 = arith.divf %108, %114 : vector<2x1x1xf32>
    %cst_47 = arith.constant 2.048000e+03 : f32
    %116 = vector.broadcast %cst_47 : f32 to vector<2x1x1xf32>
    %117 = arith.divf %113, %116 : vector<2x1x1xf32>
    %118 = arith.mulf %115, %115 : vector<2x1x1xf32>
    %119 = arith.subf %117, %118 : vector<2x1x1xf32>
    %120 = vector.broadcast %115 : vector<2x1x1xf32> to vector<2x16x128xf32>
    %121 = arith.subf %104, %120 : vector<2x16x128xf32>
    %cst_48 = arith.constant 9.99999974E-6 : f32
    %122 = vector.broadcast %cst_48 : f32 to vector<2x1x1xf32>
    %123 = arith.addf %119, %122 : vector<2x1x1xf32>
    %124 = math.rsqrt %123 : vector<2x1x1xf32>
    %125 = vector.broadcast %124 : vector<2x1x1xf32> to vector<2x16x128xf32>
    %126 = arith.mulf %121, %125 : vector<2x16x128xf32>
    %c0_49 = arith.constant 0 : index
    %c0_50 = arith.constant 0 : index
    %c0_51 = arith.constant 0 : index
    %127 = vector.load %arg4[%c0_49, %c0_50, %c0_51] : memref<2x1x128xf32, #tpu.memory_space<vmem>>, vector<2x1x128xf32>
    %128 = vector.broadcast %127 : vector<2x1x128xf32> to vector<2x16x128xf32>
    %129 = arith.mulf %126, %128 : vector<2x16x128xf32>
    %c0_52 = arith.constant 0 : index
    %c0_53 = arith.constant 0 : index
    %c0_54 = arith.constant 0 : index
    %130 = vector.load %arg5[%c0_52, %c0_53, %c0_54] : memref<2x1x128xf32, #tpu.memory_space<vmem>>, vector<2x1x128xf32>
    %131 = vector.broadcast %130 : vector<2x1x128xf32> to vector<2x16x128xf32>
    %132 = arith.addf %129, %131 : vector<2x16x128xf32>
    %133 = arith.negf %132 : vector<2x16x128xf32>
    %134 = math.exp %133 : vector<2x16x128xf32>
    %cst_55 = arith.constant 1.000000e+00 : f32
    %135 = vector.broadcast %cst_55 : f32 to vector<2x16x128xf32>
    %136 = arith.addf %135, %134 : vector<2x16x128xf32>
    %137 = arith.divf %135, %136 : vector<2x16x128xf32>
    %138 = arith.mulf %132, %137 : vector<2x16x128xf32>
    %139 = vector.shape_cast %138 : vector<2x16x128xf32> to vector<32x128xf32>
    %c1_i32_56 = arith.constant 1 : i32
    %140 = tpu.dynamic_rotate %139 by %c1_i32_56 dim 0 : vector<32x128xf32>, i32 -> vector<32x128xf32>
    %cst_57 = arith.constant 0.000000e+00 : f32
    %141 = vector.shape_cast %20 : vector<32x1xi1> to vector<32x1xi1>
    %142 = vector.broadcast %141 : vector<32x1xi1> to vector<32x128xi1>
    %143 = vector.broadcast %cst_57 : f32 to vector<32x128xf32>
    %144 = arith.select %142, %143, %140 : vector<32x128xi1>, vector<32x128xf32>
    %c31_i32_58 = arith.constant 31 : i32
    %145 = tpu.dynamic_rotate %139 by %c31_i32_58 dim 0 : vector<32x128xf32>, i32 -> vector<32x128xf32>
    %cst_59 = arith.constant 0.000000e+00 : f32
    %146 = vector.shape_cast %38 : vector<32x1xi1> to vector<32x1xi1>
    %147 = vector.broadcast %146 : vector<32x1xi1> to vector<32x128xi1>
    %148 = vector.broadcast %cst_59 : f32 to vector<32x128xf32>
    %149 = arith.select %147, %148, %145 : vector<32x128xi1>, vector<32x128xf32>
    %150 = tpu.concatenate %144, %139, %149 in 1 : vector<32x128xf32>, vector<32x128xf32>, vector<32x128xf32> -> vector<32x384xf32>
    %151 = arith.truncf %150 : vector<32x384xf32> to vector<32x384xbf16>
    %c0_60 = arith.constant 0 : index
    %c0_61 = arith.constant 0 : index
    %152 = vector.load %arg10[%c0_60, %c0_61] : memref<384x128xbf16, #tpu.memory_space<vmem>>, vector<384x128xbf16>
    %cst_62 = arith.constant dense<0.000000e+00> : vector<32x128xf32>
    %153 = tpu.matmul %151, %152, %cst_62 {dimension_numbers = #tpu.dot_dimension_numbers<[1], [0], [0], [1], [0, 0, 1, 1], [], []>} : vector<32x384xbf16>, vector<384x128xbf16>, vector<32x128xf32> -> vector<32x128xf32>
    %c0_63 = arith.constant 0 : index
    %c0_64 = arith.constant 0 : index
    %154 = vector.load %arg11[%c0_63, %c0_64] : memref<1x128xf32, #tpu.memory_space<vmem>>, vector<1x128xf32>
    %155 = vector.broadcast %154 : vector<1x128xf32> to vector<32x128xf32>
    %156 = arith.addf %153, %155 : vector<32x128xf32>
    %157 = arith.addf %156, %44 : vector<32x128xf32>
    %158 = vector.shape_cast %157 : vector<32x128xf32> to vector<2x16x128xf32>
    %c0_65 = arith.constant 0 : index
    %c0_66 = arith.constant 0 : index
    %c0_67 = arith.constant 0 : index
    %159 = vector.load %arg12[%c0_65, %c0_66, %c0_67] : memref<2x16x128xf32, #tpu.memory_space<vmem>>, vector<2x16x128xf32>
    tpu.vector_store %arg12[%c0_65, %c0_66, %c0_67], %158 {strides = array<i32>} : memref<2x16x128xf32, #tpu.memory_space<vmem>>, vector<2x16x128xf32>,
    return
  }
  func.func @transform_0(%arg0: i32) -> (i32, i32, i32) {
    %c0_i32 = arith.constant 0 : i32
    %c0_i32_0 = arith.constant 0 : i32
    %c0_i32_1 = arith.constant 0 : i32
    return %arg0, %c0_i32, %c0_i32_0 : i32, i32, i32
  }
  func.func @transform_1(%arg0: i32) -> (i32, i32, i32) {
    %c0_i32 = arith.constant 0 : i32
    %c0_i32_0 = arith.constant 0 : i32
    %c0_i32_1 = arith.constant 0 : i32
    return %arg0, %c0_i32, %c0_i32_0 : i32, i32, i32
  }
  func.func @transform_2(%arg0: i32) -> (i32, i32, i32) {
    %c0_i32 = arith.constant 0 : i32
    %c0_i32_0 = arith.constant 0 : i32
    %c0_i32_1 = arith.constant 0 : i32
    return %arg0, %c0_i32, %c0_i32_0 : i32, i32, i32
  }
  func.func @transform_3(%arg0: i32) -> (i32, i32, i32) {
    %c0_i32 = arith.constant 0 : i32
    %c0_i32_0 = arith.constant 0 : i32
    %c0_i32_1 = arith.constant 0 : i32
    return %arg0, %c0_i32, %c0_i32_0 : i32, i32, i32
  }
  func.func @transform_4(%arg0: i32) -> (i32, i32, i32) {
    %c0_i32 = arith.constant 0 : i32
    %c0_i32_0 = arith.constant 0 : i32
    %c0_i32_1 = arith.constant 0 : i32
    return %arg0, %c0_i32, %c0_i32_0 : i32, i32, i32
  }
  func.func @transform_5(%arg0: i32) -> (i32, i32) {
    %c0_i32 = arith.constant 0 : i32
    %c0_i32_0 = arith.constant 0 : i32
    %c0_i32_1 = arith.constant 0 : i32
    return %c0_i32, %c0_i32_0 : i32, i32
  }
  func.func @transform_6(%arg0: i32) -> (i32, i32) {
    %c0_i32 = arith.constant 0 : i32
    %c0_i32_0 = arith.constant 0 : i32
    %c0_i32_1 = arith.constant 0 : i32
    return %c0_i32, %c0_i32_0 : i32, i32
  }
  func.func @transform_7(%arg0: i32) -> (i32, i32) {
    %c0_i32 = arith.constant 0 : i32
    %c0_i32_0 = arith.constant 0 : i32
    %c0_i32_1 = arith.constant 0 : i32
    return %c0_i32, %c0_i32_0 : i32, i32
  }
  func.func @transform_8(%arg0: i32) -> (i32, i32) {
    %c0_i32 = arith.constant 0 : i32
    %c0_i32_0 = arith.constant 0 : i32
    %c0_i32_1 = arith.constant 0 : i32
    return %c0_i32, %c0_i32_0 : i32, i32
  }
  func.func @transform_9(%arg0: i32) -> (i32, i32) {
    %c0_i32 = arith.constant 0 : i32
    %c0_i32_0 = arith.constant 0 : i32
    %c0_i32_1 = arith.constant 0 : i32
    return %c0_i32, %c0_i32_0 : i32, i32
  }
  func.func @transform_10(%arg0: i32) -> (i32, i32) {
    %c0_i32 = arith.constant 0 : i32
    %c0_i32_0 = arith.constant 0 : i32
    %c0_i32_1 = arith.constant 0 : i32
    return %c0_i32, %c0_i32_0 : i32, i32
  }
  func.func @transform_11(%arg0: i32) -> (i32, i32, i32) {
    %c0_i32 = arith.constant 0 : i32
    %c0_i32_0 = arith.constant 0 : i32
    %c0_i32_1 = arith.constant 0 : i32
    return %arg0, %c0_i32, %c0_i32_0 : i32, i32, i32
  }
}

</mosaic_0001>

<llo_original>
// kernel: tile.58
$region0: #{tile.58}
  #allocation0 [shape = 's32[1]{0}', space=sflag, size = 0x4, scoped, tag = 'scoped memory for tile.58']
  %s0 = inlined_call_operand.vmem [shape: f32[8], index: 0, kind: input, shape index: {}]
  %s1 = inlined_call_operand.vmem [shape: f32[16,8], index: 1, kind: output, shape index: {}]
  // Predicated region
  $region2: #{tile.58} parent=0 // pred_check
    _
  $region3: #{tile.58} parent=0 // pred_check_branch
    %3 = sbr.rel (0) target = $region5
  $region4: #{tile.58} parent=0 // pred_region
    _
  $region5: #{tile.58} parent=0 // pred_fallthru
    _
  %v4 = vld [vmem:[%s0] ss:$0 sm:$0xff]
  %5 = vst [vmem:[%s1] sm:$0xff] %v4
  %s6 = scalar_lea.vmem %s1, 8
  %7 = vst [vmem:[%s6] sm:$0xff] %v4

// kernel: tile.59
$region0: #{tile.59}
  %s0 = inlined_call_operand.vmem [shape: f32[16,8], index: 0, kind: input, shape index: {}]
  %s1 = inlined_call_operand.vmem [shape: f32[1,128], index: 1, kind: output, shape index: {}]
  $region1: #{tile.59} parent=0
    #allocation0 [shape = 'u8[4096]{0}', space=vmem, size = 0x1000, scoped, tag = 'scoped mem for output reshape']
    %v2 = vld [vmem:[%s0] sm:$0x1]
    %vm3 = vcmask 64512
    %4 = vst.msk [vmem:[#allocation0] sm:$0x1] %vm3, %v2
    %s5 = scalar_lea.vmem %s0, 15
    %v6 = vld [vmem:[%s5] sm:$0x1]
    %7 = vrot.lane.b32.xlu0 %v6, 120
    %v8 = vpop.permute.xlu0 %7
    %vm9 = vcmask 1048512
    %10 = vst.msk [vmem:[#allocation0] sm:$0x1] %vm9, %v8
    %s11 = scalar_lea.vmem %s0, 14
    %v12 = vld [vmem:[%s11] sm:$0x1]
    %13 = vrot.lane.b32.xlu0 %v12, 112
    %v14 = vpop.permute.xlu0 %13
    %vm15 = vcmask 982912
    %16 = vst.msk [vmem:[#allocation0] sm:$0x1] %vm15, %v14
    %s17 = scalar_lea.vmem %s0, 13
    %v18 = vld [vmem:[%s17] sm:$0x1]
    %19 = vrot.lane.b32.xlu0 %v18, 104
    %v20 = vpop.permute.xlu0 %19
    %vm21 = vcmask 917312
    %22 = vst.msk [vmem:[#allocation0] sm:$0x1] %vm21, %v20
    %s23 = scalar_lea.vmem %s0, 12
    %v24 = vld [vmem:[%s23] sm:$0x1]
    %25 = vrot.lane.b32.xlu0 %v24, 96
    %v26 = vpop.permute.xlu0 %25
    %vm27 = vcmask 851712
    %28 = vst.msk [vmem:[#allocation0] sm:$0x1] %vm27, %v26
    %s29 = scalar_lea.vmem %s0, 11
    %v30 = vld [vmem:[%s29] sm:$0x1]
    %31 = vrot.lane.b32.xlu0 %v30, 88
    %v32 = vpop.permute.xlu0 %31
    %vm33 = vcmask 786112
    %34 = vst.msk [vmem:[#allocation0] sm:$0x1] %vm33, %v32
    %s35 = scalar_lea.vmem %s0, 10
    %v36 = vld [vmem:[%s35] sm:$0x1]
    %37 = vrot.lane.b32.xlu0 %v36, 80
    %v38 = vpop.permute.xlu0 %37
    %vm39 = vcmask 720512
    %40 = vst.msk [vmem:[#allocation0] sm:$0x1] %vm39, %v38
    %s41 = scalar_lea.vmem %s0, 9
    %v42 = vld [vmem:[%s41] sm:$0x1]
    %43 = vrot.lane.b32.xlu0 %v42, 72
    %v44 = vpop.permute.xlu0 %43
    %vm45 = vcmask 654912
    %46 = vst.msk [vmem:[#allocation0] sm:$0x1] %vm45, %v44
    %s47 = scalar_lea.vmem %s0, 8
    %v48 = vld [vmem:[%s47] sm:$0x1]
    %49 = vrot.lane.b32.xlu0 %v48, 64
    %v50 = vpop.permute.xlu0 %49
    %vm51 = vcmask 589312
    %52 = vst.msk [vmem:[#allocation0] sm:$0x1] %vm51, %v50
    %s53 = scalar_lea.vmem %s0, 7
    %v54 = vld [vmem:[%s53] sm:$0x1]
    %55 = vrot.lane.b32.xlu0 %v54, 56
    %v56 = vpop.permute.xlu0 %55
    %vm57 = vcmask 523712
    %58 = vst.msk [vmem:[#allocation0] sm:$0x1] %vm57, %v56
    %s59 = scalar_lea.vmem %s0, 6
    %v60 = vld [vmem:[%s59] sm:$0x1]
    %61 = vrot.lane.b32.xlu0 %v60, 48
    %v62 = vpop.permute.xlu0 %61
    %vm63 = vcmask 458112
    %64 = vst.msk [vmem:[#allocation0] sm:$0x1] %vm63, %v62
    %s65 = scalar_lea.vmem %s0, 5
    %v66 = vld [vmem:[%s65] sm:$0x1]
    %67 = vrot.lane.b32.xlu0 %v66, 40
    %v68 = vpop.permute.xlu0 %67
    %vm69 = vcmask 392512
    %70 = vst.msk [vmem:[#allocation0] sm:$0x1] %vm69, %v68
    %s71 = scalar_lea.vmem %s0, 4
    %v72 = vld [vmem:[%s71] sm:$0x1]
    %73 = vrot.lane.b32.xlu0 %v72, 32
    %v74 = vpop.permute.xlu0 %73
    %vm75 = vcmask 326912
    %76 = vst.msk [vmem:[#allocation0] sm:$0x1] %vm75, %v74
    %s77 = scalar_lea.vmem %s0, 3
    %v78 = vld [vmem:[%s77] sm:$0x1]
    %79 = vrot.lane.b32.xlu0 %v78, 24
    %v80 = vpop.permute.xlu0 %79
    %vm81 = vcmask 261312
    %82 = vst.msk [vmem:[#allocation0] sm:$0x1] %vm81, %v80
    %s83 = scalar_lea.vmem %s0, 2
    %v84 = vld [vmem:[%s83] sm:$0x1]
    %85 = vrot.lane.b32.xlu0 %v84, 16
    %v86 = vpop.permute.xlu0 %85
    %vm87 = vcmask 195712
    %88 = vst.msk [vmem:[#allocation0] sm:$0x1] %vm87, %v86
    %s89 = scalar_lea.vmem %s0, 1
    %v90 = vld [vmem:[%s89] sm:$0x1]
    %91 = vrot.lane.b32.xlu0 %v90, 8
    %v92 = vpop.permute.xlu0 %91
    %vm93 = vcmask 130112
    %94 = vst.msk [vmem:[#allocation0] sm:$0x1] %vm93, %v92
    %s96 = ssub.s32 2, 1
    %v97 = vld [vmem:[#allocation0] sm:%s96]
    %s99 = ssub.s32 2, 1
    %100 = vst [vmem:[%s1] sm:%s99] %v97

// kernel: res_block_forward.1
$region0: #{res_block_forward.1}
  #allocation0 [shape = 'u32[]', space=smem, size = 0x4, offset = 0x4, fixed_abs, tag = 'smem constant byte address 0x4 - core index']
  #allocation1 [shape = 'u32[72,128]{1,0:T(1,128)}', space=vmem, size = 0x9000, scoped, tag = 'internal scratch']
  %s0 = inlined_call_operand.vmem [shape: f32[2,16,64], index: 0, kind: input, shape index: {}]
  %s1 = inlined_call_operand.vmem [shape: f32[2,1,64], index: 1, kind: input, shape index: {}]
  %s2 = inlined_call_operand.vmem [shape: f32[2,1,64], index: 2, kind: input, shape index: {}]
  %s3 = inlined_call_operand.vmem [shape: f32[2,1,128], index: 3, kind: input, shape index: {}]
  %s4 = inlined_call_operand.vmem [shape: f32[2,1,128], index: 4, kind: input, shape index: {}]
  %s5 = inlined_call_operand.vmem [shape: bf16[64,128], index: 5, kind: input, shape index: {}]
  %s6 = inlined_call_operand.vmem [shape: f32[1,128], index: 6, kind: input, shape index: {}]
  %s7 = inlined_call_operand.vmem [shape: bf16[192,128], index: 7, kind: input, shape index: {}]
  %s8 = inlined_call_operand.vmem [shape: f32[1,128], index: 8, kind: input, shape index: {}]
  %s9 = inlined_call_operand.vmem [shape: bf16[384,128], index: 9, kind: input, shape index: {}]
  %s10 = inlined_call_operand.vmem [shape: f32[1,128], index: 10, kind: input, shape index: {}]
  %s11 = inlined_call_operand.vmem [shape: f32[2,16,128], index: 11, kind: output, shape index: {}]
  %s12 = sld [smem:[#allocation0]]
  $region54: #{res_block_forward.1} parent=0
    _
  %s14 = ssub.s32 1, %s12
  %s15 = scalar_select 0, %s14, %s12
  // Predicated region
  $region2: #{res_block_forward.1} parent=0 // pred_check
    _
  $region3: #{res_block_forward.1} parent=0 // pred_check_branch
    %17 = sbr.rel (0) target = $region5
  $region4: #{res_block_forward.1} parent=0 // pred_region
    _
  $region5: #{res_block_forward.1} parent=0 // pred_fallthru
    _
  // Predicated region
  $region6: #{res_block_forward.1} parent=0 // pred_check
    _
  $region7: #{res_block_forward.1} parent=0 // pred_check_branch
    %19 = sbr.rel (0) target = $region9
  $region8: #{res_block_forward.1} parent=0 // pred_region
    _
  $region9: #{res_block_forward.1} parent=0 // pred_fallthru
    _
  // Predicated region
  $region10: #{res_block_forward.1} parent=0 // pred_check
    _
  $region11: #{res_block_forward.1} parent=0 // pred_check_branch
    %21 = sbr.rel (0) target = $region13
  $region12: #{res_block_forward.1} parent=0 // pred_region
    _
  $region13: #{res_block_forward.1} parent=0 // pred_fallthru
    _
  // Predicated region
  $region14: #{res_block_forward.1} parent=0 // pred_check
    _
  $region15: #{res_block_forward.1} parent=0 // pred_check_branch
    %23 = sbr.rel (0) target = $region17
  $region16: #{res_block_forward.1} parent=0 // pred_region
    _
  $region17: #{res_block_forward.1} parent=0 // pred_fallthru
    _
  // Predicated region
  $region18: #{res_block_forward.1} parent=0 // pred_check
    _
  $region19: #{res_block_forward.1} parent=0 // pred_check_branch
    %25 = sbr.rel (0) target = $region21
  $region20: #{res_block_forward.1} parent=0 // pred_region
    _
  $region21: #{res_block_forward.1} parent=0 // pred_fallthru
    _
  // Predicated region
  $region22: #{res_block_forward.1} parent=0 // pred_check
    _
  $region23: #{res_block_forward.1} parent=0 // pred_check_branch
    %27 = sbr.rel (0) target = $region25
  $region24: #{res_block_forward.1} parent=0 // pred_region
    _
  $region25: #{res_block_forward.1} parent=0 // pred_fallthru
    _
  // Predicated region
  $region26: #{res_block_forward.1} parent=0 // pred_check
    _
  $region27: #{res_block_forward.1} parent=0 // pred_check_branch
    %29 = sbr.rel (0) target = $region29
  $region28: #{res_block_forward.1} parent=0 // pred_region
    _
  $region29: #{res_block_forward.1} parent=0 // pred_fallthru
    _
  // Predicated region
  $region30: #{res_block_forward.1} parent=0 // pred_check
    _
  $region31: #{res_block_forward.1} parent=0 // pred_check_branch
    %31 = sbr.rel (0) target = $region33
  $region32: #{res_block_forward.1} parent=0 // pred_region
    _
  $region33: #{res_block_forward.1} parent=0 // pred_fallthru
    _
  // Predicated region
  $region34: #{res_block_forward.1} parent=0 // pred_check
    _
  $region35: #{res_block_forward.1} parent=0 // pred_check_branch
    %33 = sbr.rel (0) target = $region37
  $region36: #{res_block_forward.1} parent=0 // pred_region
    _
  $region37: #{res_block_forward.1} parent=0 // pred_fallthru
    _
  // Predicated region
  $region38: #{res_block_forward.1} parent=0 // pred_check
    _
  $region39: #{res_block_forward.1} parent=0 // pred_check_branch
    %35 = sbr.rel (0) target = $region41
  $region40: #{res_block_forward.1} parent=0 // pred_region
    _
  $region41: #{res_block_forward.1} parent=0 // pred_fallthru
    _
  // Predicated region
  $region42: #{res_block_forward.1} parent=0 // pred_check
    _
  $region43: #{res_block_forward.1} parent=0 // pred_check_branch
    %37 = sbr.rel (0) target = $region45
  $region44: #{res_block_forward.1} parent=0 // pred_region
    _
  $region45: #{res_block_forward.1} parent=0 // pred_fallthru
    _
  %v39 = vld [vmem:[%s0] sm:$0xff]
  %v40 = vld [vmem:[%s0 + $0x8] sm:$0xff]
  %v41 = vld [vmem:[%s0 + $0x10] sm:$0xff]
  %v42 = vld [vmem:[%s0 + $0x18] sm:$0xff]
  %v43 = vlaneseq
  %v44 = vshrl.u32 %v43, 7
  %v45 = vadd.s32 %v44, 8
  %v46 = vadd.s32 %v44, 16
  %v47 = vadd.s32 %v44, 24
  %vm48 = vcmp.lt.s32.totalorder %v44, 0
  %v49 = vsub.s32 0, %v44
  %v50 = vsel %vm48, %v49, %v44
  %v51 = vshrl.u32 %v50, 4
  %v52 = vand.u32 %v50, 15
  %v53 = vsub.s32 0, %v52
  %v54 = vsel %vm48, %v53, %v52
  %vm55 = vcmp.lt.s32.totalorder %v45, 0
  %v56 = vsub.s32 0, %v45
  %v57 = vsel %vm55, %v56, %v45
  %v58 = vshrl.u32 %v57, 4
  %v59 = vand.u32 %v57, 15
  %v60 = vsub.s32 0, %v59
  %v61 = vsel %vm55, %v60, %v59
  %vm62 = vcmp.lt.s32.totalorder %v46, 0
  %v63 = vsub.s32 0, %v46
  %v64 = vsel %vm62, %v63, %v46
  %v65 = vshrl.u32 %v64, 4
  %v66 = vand.u32 %v64, 15
  %v67 = vsub.s32 0, %v66
  %v68 = vsel %vm62, %v67, %v66
  %vm69 = vcmp.lt.s32.totalorder %v47, 0
  %v70 = vsub.s32 0, %v47
  %v71 = vsel %vm69, %v70, %v47
  %v72 = vshrl.u32 %v71, 4
  %v73 = vand.u32 %v71, 15
  %v74 = vsub.s32 0, %v73
  %v75 = vsel %vm69, %v74, %v73
  %vm76 = vcmp.ne.s32.totalorder %v54, 0
  %vm77 = vcmp.ne.s32.totalorder %v61, 0
  %vm78 = vcmp.ne.s32.totalorder %v68, 0
  %vm79 = vcmp.ne.s32.totalorder %v75, 0
  %vm80 = vcmp.lt.s32.totalorder %v54, 0
  %vm81 = vcmp.lt.s32.totalorder %v61, 0
  %vm82 = vcmp.lt.s32.totalorder %v68, 0
  %vm83 = vcmp.lt.s32.totalorder %v75, 0
  %vm84 = vmand %vm80, %vm76
  %vm85 = vmand %vm81, %vm77
  %vm86 = vmand %vm82, %vm78
  %vm87 = vmand %vm83, %vm79
  %v88 = vadd.s32 %v54, 16
  %v89 = vadd.s32 %v61, 16
  %v90 = vadd.s32 %v68, 16
  %v91 = vadd.s32 %v75, 16
  %v92 = vsel %vm84, %v88, %v54
  %v93 = vsel %vm85, %v89, %v61
  %v94 = vsel %vm86, %v90, %v68
  %v95 = vsel %vm87, %v91, %v75
  %vm96 = vcmp.eq.s32.totalorder %v92, 0
  %vm97 = vcmp.eq.s32.totalorder %v93, 0
  %vm98 = vcmp.eq.s32.totalorder %v94, 0
  %vm99 = vcmp.eq.s32.totalorder %v95, 0
  %vm100 = vcmp.eq.s32.totalorder %v92, 15
  %vm101 = vcmp.eq.s32.totalorder %v93, 15
  %vm102 = vcmp.eq.s32.totalorder %v94, 15
  %vm103 = vcmp.eq.s32.totalorder %v95, 15
  %v104 = vpack.c.bf16 %v40, %v39
  %v105 = vpack.c.bf16 %v42, %v41
  %v106 = vld [vmem:[%s5] sm:$0xf]
  %v107 = vld [vmem:[%s5 + $0x4] sm:$0xf]
  %v108 = vld [vmem:[%s5 + $0x8] sm:$0xf]
  %v109 = vld [vmem:[%s5 + $0xc] sm:$0xf]
  %v110 = vld [vmem:[%s5 + $0x10] sm:$0xf]
  %v111 = vld [vmem:[%s5 + $0x14] sm:$0xf]
  %v112 = vld [vmem:[%s5 + $0x18] sm:$0xf]
  %v113 = vld [vmem:[%s5 + $0x1c] sm:$0xf]
  %v114 = vld [vmem:[%s6] sm:$0x1]
  %v116 = vperm.slane %v114, 0
  %v126 = vunpack.c.l.b16 %v106
  %v127 = vunpack.c.l.b16 %v107
  %v128 = vunpack.c.l.b16 %v108
  %v129 = vunpack.c.l.b16 %v109
  %v130 = vunpack.c.l.b16 %v110
  %v131 = vunpack.c.l.b16 %v111
  %v132 = vunpack.c.l.b16 %v112
  %v133 = vunpack.c.l.b16 %v113
  %v134 = vpack.c.b16 %v127, %v126
  %v135 = vpack.c.b16 %v129, %v128
  %v136 = vpack.c.b16 %v131, %v130
  %v137 = vpack.c.b16 %v133, %v132
  %vm142 = vcmask 523264
  %v144 = vsel %vm142, %v104, 0
  %v147 = vsel %vm142, %v105, 0
  %149 = vmatpush.bf16.msra.mxu0 0
  %150 = vmatpush.bf16.msra.mxu0 0
  %151 = vmatpush.bf16.msra.mxu0 0
  %152 = vmatpush.bf16.msra.mxu0 0
  %153 = vmatpush.bf16.msra.mxu0 %v137
  %154 = vmatpush.bf16.msra.mxu0 %v136
  %155 = vmatpush.bf16.msra.mxu0 %v135
  %156 = vmatpush.bf16.msra.mxu0 %v134
  %157 = vmatmul.bf16.gmra.mxu0 %v144
  %v158 = vpop.f32.mrf.mxu0
  %v159 = vadd.f32 %v116, %v158
  %v160 = vpop.f32.mrf.mxu0
  %v161 = vadd.f32 %v116, %v160
  %162 = vmatmul.bf16.gmra.mxu0 %v147
  %v163 = vpop.f32.mrf.mxu0
  %v164 = vadd.f32 %v116, %v163
  %v165 = vpop.f32.mrf.mxu0
  %v166 = vadd.f32 %v116, %v165
  %167 = vdwg.mxu0
  %v168 = vsel %vm142, %v39, 0.0
  %169 = vadd.xlane.f32.xlu0 %v168
  %v170 = vpop.xlane.xlu0 %169
  %v171 = vsel %vm142, %v40, 0.0
  %172 = vadd.xlane.f32.xlu0 %v171
  %v173 = vpop.xlane.xlu0 %172
  %v174 = vsel %vm142, %v41, 0.0
  %175 = vadd.xlane.f32.xlu0 %v174
  %v176 = vpop.xlane.xlu0 %175
  %v177 = vsel %vm142, %v42, 0.0
  %178 = vadd.xlane.f32.xlu0 %v177
  %v179 = vpop.xlane.xlu0 %178
  %v180 = vadd.f32 %v170, %v173
  %v181 = vrot.slane %v180, 4
  %v182 = vadd.f32 %v180, %v181
  %v183 = vrot.slane %v182, 2
  %v184 = vadd.f32 %v182, %v183
  %v185 = vrot.slane %v184, 1
  %v186 = vadd.f32 %v184, %v185
  %v187 = vadd.f32 %v176, %v179
  %v188 = vrot.slane %v187, 4
  %v189 = vadd.f32 %v187, %v188
  %v190 = vrot.slane %v189, 2
  %v191 = vadd.f32 %v189, %v190
  %v192 = vrot.slane %v191, 1
  %v193 = vadd.f32 %v191, %v192
  %v194 = vmul.f32 %v39, %v39
  %v195 = vmul.f32 %v40, %v40
  %v196 = vmul.f32 %v41, %v41
  %v197 = vmul.f32 %v42, %v42
  %v198 = vsel %vm142, %v194, 0.0
  %199 = vadd.xlane.f32.xlu0 %v198
  %v200 = vpop.xlane.xlu0 %199
  %v201 = vsel %vm142, %v195, 0.0
  %202 = vadd.xlane.f32.xlu0 %v201
  %v203 = vpop.xlane.xlu0 %202
  %v204 = vsel %vm142, %v196, 0.0
  %205 = vadd.xlane.f32.xlu0 %v204
  %v206 = vpop.xlane.xlu0 %205
  %v207 = vsel %vm142, %v197, 0.0
  %208 = vadd.xlane.f32.xlu0 %v207
  %v209 = vpop.xlane.xlu0 %208
  %v210 = vadd.f32 %v200, %v203
  %v211 = vrot.slane %v210, 4
  %v212 = vadd.f32 %v210, %v211
  %v213 = vrot.slane %v212, 2
  %v214 = vadd.f32 %v212, %v213
  %v215 = vrot.slane %v214, 1
  %v216 = vadd.f32 %v214, %v215
  %v217 = vadd.f32 %v206, %v209
  %v218 = vrot.slane %v217, 4
  %v219 = vadd.f32 %v217, %v218
  %v220 = vrot.slane %v219, 2
  %v221 = vadd.f32 %v219, %v220
  %v222 = vrot.slane %v221, 1
  %v223 = vadd.f32 %v221, %v222
  %v224 = vrcp.pop 1024.0
  %v225 = vmul.f32 1024.0, %v224
  %v226 = vsub.f32 1.0, %v225
  %v227 = vmul.f32 %v224, %v226
  %v228 = vadd.f32 %v224, %v227
  %vm229 = vweird.f32 %v224
  %v230 = vsel %vm229, %v224, %v228
  %v231 = vmul.f32 %v186, %v230
  %v232 = vmul.f32 %v193, %v230
  %v233 = vmul.f32 %v216, %v230
  %v234 = vmul.f32 %v223, %v230
  %v235 = vmul.f32 %v231, %v231
  %v236 = vmul.f32 %v232, %v232
  %v237 = vsub.f32 %v233, %v235
  %v238 = vsub.f32 %v234, %v236
  %v239 = vsub.f32 %v39, %v231
  %v240 = vsub.f32 %v40, %v231
  %v241 = vsub.f32 %v41, %v232
  %v242 = vsub.f32 %v42, %v232
  %v243 = vadd.f32 %v237, 1e-05
  %v244 = vadd.f32 %v238, 1e-05
  %v245 = vrsqrt.pop %v243
  %v246 = vmul.f32 %v245, %v243
  %v247 = vmul.f32 %v246, %v245
  %v248 = vmul.f32 0.5, %v247
  %v249 = vsub.f32 1.5, %v248
  %v250 = vmul.f32 %v245, %v249
  %vm251 = vweird.f32 %v243
  %vm252 = vweird.f32 %v245
  %vm253 = vmor %vm251, %vm252
  %v254 = vsel %vm253, %v245, %v250
  %v255 = vrsqrt.pop %v244
  %v256 = vmul.f32 %v255, %v244
  %v257 = vmul.f32 %v256, %v255
  %v258 = vmul.f32 0.5, %v257
  %v259 = vsub.f32 1.5, %v258
  %v260 = vmul.f32 %v255, %v259
  %vm261 = vweird.f32 %v244
  %vm262 = vweird.f32 %v255
  %vm263 = vmor %vm261, %vm262
  %v264 = vsel %vm263, %v255, %v260
  %v265 = vmul.f32 %v239, %v254
  %v266 = vmul.f32 %v240, %v254
  %v267 = vmul.f32 %v241, %v264
  %v268 = vmul.f32 %v242, %v264
  %v269 = vld [vmem:[%s1] sm:$0x1]
  %v270 = vld [vmem:[%s1 + $0x1] sm:$0x1]
  %v273 = vperm.slane %v269, 0
  %v274 = vperm.slane %v270, 0
  %v277 = vmul.f32 %v265, %v273
  %v278 = vmul.f32 %v266, %v273
  %v279 = vmul.f32 %v267, %v274
  %v280 = vmul.f32 %v268, %v274
  %v281 = vld [vmem:[%s2] sm:$0x1]
  %v282 = vld [vmem:[%s2 + $0x1] sm:$0x1]
  %v285 = vperm.slane %v281, 0
  %v286 = vperm.slane %v282, 0
  %v289 = vadd.f32 %v277, %v285
  %v290 = vadd.f32 %v278, %v285
  %v291 = vadd.f32 %v279, %v286
  %v292 = vadd.f32 %v280, %v286
  %v293 = vxor.u32 %v289, 2147483648
  %v294 = vxor.u32 %v290, 2147483648
  %v295 = vxor.u32 %v291, 2147483648
  %v296 = vxor.u32 %v292, 2147483648
  %v297 = vmul.f32 %v293, 1.442695
  %v298 = vpow.pop %v297
  %v299 = vmul.f32 %v294, 1.442695
  %v300 = vpow.pop %v299
  %v301 = vmul.f32 %v295, 1.442695
  %v302 = vpow.pop %v301
  %v303 = vmul.f32 %v296, 1.442695
  %v304 = vpow.pop %v303
  %v305 = vadd.f32 %v298, 1.0
  %v306 = vadd.f32 %v300, 1.0
  %v307 = vadd.f32 %v302, 1.0
  %v308 = vadd.f32 %v304, 1.0
  %v309 = vrcp.pop %v305
  %v310 = vmul.f32 %v305, %v309
  %v311 = vsub.f32 1.0, %v310
  %v312 = vmul.f32 %v309, %v311
  %v313 = vadd.f32 %v309, %v312
  %vm314 = vweird.f32 %v305
  %vm315 = vweird.f32 %v309
  %vm316 = vmor %vm314, %vm315
  %v317 = vsel %vm316, %v309, %v313
  %v318 = vand.u32 2147483647, %v305
  %vm319 = vcmp.eq.f32.partialorder %v318, 8.507059e+37
  %v320 = vand.u32 %v305, 2147483648
  %v321 = vor.u32 1.1754944e-38, %v320
  %v322 = vsel %vm319, %v321, %v317
  %v323 = vmul.f32 1.0, %v322
  %v324 = vrcp.pop %v306
  %v325 = vmul.f32 %v306, %v324
  %v326 = vsub.f32 1.0, %v325
  %v327 = vmul.f32 %v324, %v326
  %v328 = vadd.f32 %v324, %v327
  %vm329 = vweird.f32 %v306
  %vm330 = vweird.f32 %v324
  %vm331 = vmor %vm329, %vm330
  %v332 = vsel %vm331, %v324, %v328
  %v333 = vand.u32 2147483647, %v306
  %vm334 = vcmp.eq.f32.partialorder %v333, 8.507059e+37
  %v335 = vand.u32 %v306, 2147483648
  %v336 = vor.u32 1.1754944e-38, %v335
  %v337 = vsel %vm334, %v336, %v332
  %v338 = vmul.f32 1.0, %v337
  %v339 = vrcp.pop %v307
  %v340 = vmul.f32 %v307, %v339
  %v341 = vsub.f32 1.0, %v340
  %v342 = vmul.f32 %v339, %v341
  %v343 = vadd.f32 %v339, %v342
  %vm344 = vweird.f32 %v307
  %vm345 = vweird.f32 %v339
  %vm346 = vmor %vm344, %vm345
  %v347 = vsel %vm346, %v339, %v343
  %v348 = vand.u32 2147483647, %v307
  %vm349 = vcmp.eq.f32.partialorder %v348, 8.507059e+37
  %v350 = vand.u32 %v307, 2147483648
  %v351 = vor.u32 1.1754944e-38, %v350
  %v352 = vsel %vm349, %v351, %v347
  %v353 = vmul.f32 1.0, %v352
  %v354 = vrcp.pop %v308
  %v355 = vmul.f32 %v308, %v354
  %v356 = vsub.f32 1.0, %v355
  %v357 = vmul.f32 %v354, %v356
  %v358 = vadd.f32 %v354, %v357
  %vm359 = vweird.f32 %v308
  %vm360 = vweird.f32 %v354
  %vm361 = vmor %vm359, %vm360
  %v362 = vsel %vm361, %v354, %v358
  %v363 = vand.u32 2147483647, %v308
  %vm364 = vcmp.eq.f32.partialorder %v363, 8.507059e+37
  %v365 = vand.u32 %v308, 2147483648
  %v366 = vor.u32 1.1754944e-38, %v365
  %v367 = vsel %vm364, %v366, %v362
  %v368 = vmul.f32 1.0, %v367
  %v369 = vmul.f32 %v289, %v323
  %v370 = vmul.f32 %v290, %v338
  %v371 = vmul.f32 %v291, %v353
  %v372 = vmul.f32 %v292, %v368
  %v373 = vrot.slane %v369, 7
  %v374 = vrot.slane %v370, 7
  %v375 = vrot.slane %v371, 7
  %v376 = vrot.slane %v372, 7
  %vm377 = vcmp.lt.s32.totalorder %v44, 1
  %v378 = vsel %vm377, %v375, %v376
  %v379 = vsel %vm377, %v374, %v375
  %v380 = vsel %vm377, %v373, %v374
  %v381 = vsel %vm377, %v376, %v373
  %v382 = vsel %vm96, 1, 0
  %v383 = vsel %vm97, 1, 0
  %v384 = vsel %vm98, 1, 0
  %v385 = vsel %vm99, 1, 0
  %vm386 = vcmp.eq.s32.totalorder %v382, 1
  %vm387 = vcmp.eq.s32.totalorder %v383, 1
  %vm388 = vcmp.eq.s32.totalorder %v384, 1
  %vm389 = vcmp.eq.s32.totalorder %v385, 1
  %v390 = vsel %vm386, 0.0, %v381
  %v391 = vsel %vm387, 0.0, %v380
  %v392 = vsel %vm388, 0.0, %v379
  %v393 = vsel %vm389, 0.0, %v378
  %v394 = vrot.slane %v369, 1
  %v395 = vrot.slane %v370, 1
  %v396 = vrot.slane %v371, 1
  %v397 = vrot.slane %v372, 1
  %vm398 = vcmp.lt.s32.totalorder %v44, 7
  %v399 = vsel %vm398, %v396, %v397
  %v400 = vsel %vm398, %v395, %v396
  %v401 = vsel %vm398, %v394, %v395
  %v402 = vsel %vm398, %v397, %v394
  %v403 = vsel %vm100, 1, 0
  %v404 = vsel %vm101, 1, 0
  %v405 = vsel %vm102, 1, 0
  %v406 = vsel %vm103, 1, 0
  %vm407 = vcmp.eq.s32.totalorder %v403, 1
  %vm408 = vcmp.eq.s32.totalorder %v404, 1
  %vm409 = vcmp.eq.s32.totalorder %v405, 1
  %vm410 = vcmp.eq.s32.totalorder %v406, 1
  %v411 = vsel %vm407, 0.0, %v401
  %v412 = vsel %vm408, 0.0, %v400
  %v413 = vsel %vm409, 0.0, %v399
  %v414 = vsel %vm410, 0.0, %v402
  %v415 = vpack.c.bf16 %v370, %v369
  %v416 = vpack.c.bf16 %v372, %v371
  %v417 = vld [vmem:[%s7 + $0x20] sm:$0xf]
  %v418 = vld [vmem:[%s7 + $0x24] sm:$0xf]
  %v419 = vld [vmem:[%s7 + $0x28] sm:$0xf]
  %v420 = vld [vmem:[%s7 + $0x2c] sm:$0xf]
  %v421 = vld [vmem:[%s7 + $0x30] sm:$0xf]
  %v422 = vld [vmem:[%s7 + $0x34] sm:$0xf]
  %v423 = vld [vmem:[%s7 + $0x38] sm:$0xf]
  %v424 = vld [vmem:[%s7 + $0x3c] sm:$0xf]
  %v425 = vpack.c.bf16 %v391, %v390
  %v426 = vpack.c.bf16 %v393, %v392
  %v427 = vld [vmem:[%s7] sm:$0xf]
  %v428 = vld [vmem:[%s7 + $0x4] sm:$0xf]
  %v429 = vld [vmem:[%s7 + $0x8] sm:$0xf]
  %v430 = vld [vmem:[%s7 + $0xc] sm:$0xf]
  %v431 = vld [vmem:[%s7 + $0x10] sm:$0xf]
  %v432 = vld [vmem:[%s7 + $0x14] sm:$0xf]
  %v433 = vld [vmem:[%s7 + $0x18] sm:$0xf]
  %v434 = vld [vmem:[%s7 + $0x1c] sm:$0xf]
  %v443 = vunpack.c.l.b16 %v427
  %v444 = vunpack.c.l.b16 %v428
  %v445 = vunpack.c.l.b16 %v429
  %v446 = vunpack.c.l.b16 %v430
  %v447 = vunpack.c.l.b16 %v431
  %v448 = vunpack.c.l.b16 %v432
  %v449 = vunpack.c.l.b16 %v433
  %v450 = vunpack.c.l.b16 %v434
  %v451 = vpack.c.b16 %v444, %v443
  %v452 = vpack.c.b16 %v446, %v445
  %v453 = vpack.c.b16 %v448, %v447
  %v454 = vpack.c.b16 %v450, %v449
  %v460 = vsel %vm142, %v425, 0
  %v463 = vsel %vm142, %v426, 0
  %465 = vmatpush.bf16.msra.mxu0 0
  %466 = vmatpush.bf16.msra.mxu0 0
  %467 = vmatpush.bf16.msra.mxu0 0
  %468 = vmatpush.bf16.msra.mxu0 0
  %469 = vmatpush.bf16.msra.mxu0 %v454
  %470 = vmatpush.bf16.msra.mxu0 %v453
  %471 = vmatpush.bf16.msra.mxu0 %v452
  %472 = vmatpush.bf16.msra.mxu0 %v451
  %473 = vmatmul.bf16.gmra.mxu0 %v460
  %v474 = vpop.f32.mrf.mxu0
  %v475 = vadd.f32 0.0, %v474
  %v476 = vpop.f32.mrf.mxu0
  %v477 = vadd.f32 0.0, %v476
  %478 = vmatmul.bf16.gmra.mxu0 %v463
  %v479 = vpop.f32.mrf.mxu0
  %v480 = vadd.f32 0.0, %v479
  %v481 = vpop.f32.mrf.mxu0
  %v482 = vadd.f32 0.0, %v481
  %483 = vdwg.mxu0
  %v492 = vunpack.c.l.b16 %v417
  %v493 = vunpack.c.l.b16 %v418
  %v494 = vunpack.c.l.b16 %v419
  %v495 = vunpack.c.l.b16 %v420
  %v496 = vunpack.c.l.b16 %v421
  %v497 = vunpack.c.l.b16 %v422
  %v498 = vunpack.c.l.b16 %v423
  %v499 = vunpack.c.l.b16 %v424
  %v500 = vpack.c.b16 %v493, %v492
  %v501 = vpack.c.b16 %v495, %v494
  %v502 = vpack.c.b16 %v497, %v496
  %v503 = vpack.c.b16 %v499, %v498
  %v509 = vsel %vm142, %v415, 0
  %v512 = vsel %vm142, %v416, 0
  %514 = vmatpush.bf16.msra.mxu0 0
  %515 = vmatpush.bf16.msra.mxu0 0
  %516 = vmatpush.bf16.msra.mxu0 0
  %517 = vmatpush.bf16.msra.mxu0 0
  %518 = vmatpush.bf16.msra.mxu0 %v503
  %519 = vmatpush.bf16.msra.mxu0 %v502
  %520 = vmatpush.bf16.msra.mxu0 %v501
  %521 = vmatpush.bf16.msra.mxu0 %v500
  %522 = vmatmul.bf16.gmra.mxu0 %v509
  %v523 = vpop.f32.mrf.mxu0
  %v524 = vadd.f32 %v475, %v523
  %v525 = vpop.f32.mrf.mxu0
  %v526 = vadd.f32 %v477, %v525
  %527 = vmatmul.bf16.gmra.mxu0 %v512
  %v528 = vpop.f32.mrf.mxu0
  %v529 = vadd.f32 %v480, %v528
  %v530 = vpop.f32.mrf.mxu0
  %v531 = vadd.f32 %v482, %v530
  %532 = vdwg.mxu0
  %v533 = vpack.c.bf16 %v412, %v411
  %v534 = vpack.c.bf16 %v414, %v413
  %v535 = vld [vmem:[%s7 + $0x40] sm:$0xf]
  %v536 = vld [vmem:[%s7 + $0x44] sm:$0xf]
  %v537 = vld [vmem:[%s7 + $0x48] sm:$0xf]
  %v538 = vld [vmem:[%s7 + $0x4c] sm:$0xf]
  %v539 = vld [vmem:[%s7 + $0x50] sm:$0xf]
  %v540 = vld [vmem:[%s7 + $0x54] sm:$0xf]
  %v541 = vld [vmem:[%s7 + $0x58] sm:$0xf]
  %v542 = vld [vmem:[%s7 + $0x5c] sm:$0xf]
  %v551 = vunpack.c.l.b16 %v535
  %v552 = vunpack.c.l.b16 %v536
  %v553 = vunpack.c.l.b16 %v537
  %v554 = vunpack.c.l.b16 %v538
  %v555 = vunpack.c.l.b16 %v539
  %v556 = vunpack.c.l.b16 %v540
  %v557 = vunpack.c.l.b16 %v541
  %v558 = vunpack.c.l.b16 %v542
  %v559 = vpack.c.b16 %v552, %v551
  %v560 = vpack.c.b16 %v554, %v553
  %v561 = vpack.c.b16 %v556, %v555
  %v562 = vpack.c.b16 %v558, %v557
  %v568 = vsel %vm142, %v533, 0
  %v571 = vsel %vm142, %v534, 0
  %573 = vmatpush.bf16.msra.mxu0 0
  %574 = vmatpush.bf16.msra.mxu0 0
  %575 = vmatpush.bf16.msra.mxu0 0
  %576 = vmatpush.bf16.msra.mxu0 0
  %577 = vmatpush.bf16.msra.mxu0 %v562
  %578 = vmatpush.bf16.msra.mxu0 %v561
  %579 = vmatpush.bf16.msra.mxu0 %v560
  %580 = vmatpush.bf16.msra.mxu0 %v559
  %581 = vmatmul.bf16.gmra.mxu0 %v568
  %v582 = vpop.f32.mrf.mxu0
  %v583 = vadd.f32 0.0, %v582
  %v584 = vpop.f32.mrf.mxu0
  %v585 = vadd.f32 0.0, %v584
  %586 = vmatmul.bf16.gmra.mxu0 %v571
  %v587 = vpop.f32.mrf.mxu0
  %v588 = vadd.f32 0.0, %v587
  %v589 = vpop.f32.mrf.mxu0
  %v590 = vadd.f32 0.0, %v589
  %591 = vdwg.mxu0
  %v592 = vadd.f32 %v524, %v583
  %v593 = vadd.f32 %v526, %v585
  %v594 = vadd.f32 %v529, %v588
  %v595 = vadd.f32 %v531, %v590
  %v596 = vld [vmem:[%s8] sm:$0x1]
  %v598 = vperm.slane %v596, 0
  %v600 = vadd.f32 %v592, %v598
  %v601 = vadd.f32 %v593, %v598
  %v602 = vadd.f32 %v594, %v598
  %v603 = vadd.f32 %v595, %v598
  %604 = vadd.xlane.f32.xlu0 %v600
  %v605 = vpop.xlane.xlu0 %604
  %606 = vadd.xlane.f32.xlu0 %v601
  %v607 = vpop.xlane.xlu0 %606
  %608 = vadd.xlane.f32.xlu0 %v602
  %v609 = vpop.xlane.xlu0 %608
  %610 = vadd.xlane.f32.xlu0 %v603
  %v611 = vpop.xlane.xlu0 %610
  %v612 = vadd.f32 %v605, %v607
  %v613 = vrot.slane %v612, 4
  %v614 = vadd.f32 %v612, %v613
  %v615 = vrot.slane %v614, 2
  %v616 = vadd.f32 %v614, %v615
  %v617 = vrot.slane %v616, 1
  %v618 = vadd.f32 %v616, %v617
  %v619 = vadd.f32 %v609, %v611
  %v620 = vrot.slane %v619, 4
  %v621 = vadd.f32 %v619, %v620
  %v622 = vrot.slane %v621, 2
  %v623 = vadd.f32 %v621, %v622
  %v624 = vrot.slane %v623, 1
  %v625 = vadd.f32 %v623, %v624
  %v626 = vmul.f32 %v600, %v600
  %v627 = vmul.f32 %v601, %v601
  %v628 = vmul.f32 %v602, %v602
  %v629 = vmul.f32 %v603, %v603
  %630 = vadd.xlane.f32.xlu0 %v626
  %v631 = vpop.xlane.xlu0 %630
  %632 = vadd.xlane.f32.xlu0 %v627
  %v633 = vpop.xlane.xlu0 %632
  %634 = vadd.xlane.f32.xlu0 %v628
  %v635 = vpop.xlane.xlu0 %634
  %636 = vadd.xlane.f32.xlu0 %v629
  %v637 = vpop.xlane.xlu0 %636
  %v638 = vadd.f32 %v631, %v633
  %v639 = vrot.slane %v638, 4
  %v640 = vadd.f32 %v638, %v639
  %v641 = vrot.slane %v640, 2
  %v642 = vadd.f32 %v640, %v641
  %v643 = vrot.slane %v642, 1
  %v644 = vadd.f32 %v642, %v643
  %v645 = vadd.f32 %v635, %v637
  %v646 = vrot.slane %v645, 4
  %v647 = vadd.f32 %v645, %v646
  %v648 = vrot.slane %v647, 2
  %v649 = vadd.f32 %v647, %v648
  %v650 = vrot.slane %v649, 1
  %v651 = vadd.f32 %v649, %v650
  %v652 = vrcp.pop 2048.0
  %v653 = vmul.f32 2048.0, %v652
  %v654 = vsub.f32 1.0, %v653
  %v655 = vmul.f32 %v652, %v654
  %v656 = vadd.f32 %v652, %v655
  %vm657 = vweird.f32 %v652
  %v658 = vsel %vm657, %v652, %v656
  %v659 = vmul.f32 %v618, %v658
  %v660 = vmul.f32 %v625, %v658
  %v661 = vmul.f32 %v644, %v658
  %v662 = vmul.f32 %v651, %v658
  %v663 = vmul.f32 %v659, %v659
  %v664 = vmul.f32 %v660, %v660
  %v665 = vsub.f32 %v661, %v663
  %v666 = vsub.f32 %v662, %v664
  %v667 = vsub.f32 %v600, %v659
  %v668 = vsub.f32 %v601, %v659
  %v669 = vsub.f32 %v602, %v660
  %v670 = vsub.f32 %v603, %v660
  %v671 = vadd.f32 %v665, 1e-05
  %v672 = vadd.f32 %v666, 1e-05
  %v673 = vrsqrt.pop %v671
  %v674 = vmul.f32 %v673, %v671
  %v675 = vmul.f32 %v674, %v673
  %v676 = vmul.f32 0.5, %v675
  %v677 = vsub.f32 1.5, %v676
  %v678 = vmul.f32 %v673, %v677
  %vm679 = vweird.f32 %v671
  %vm680 = vweird.f32 %v673
  %vm681 = vmor %vm679, %vm680
  %v682 = vsel %vm681, %v673, %v678
  %v683 = vrsqrt.pop %v672
  %v684 = vmul.f32 %v683, %v672
  %v685 = vmul.f32 %v684, %v683
  %v686 = vmul.f32 0.5, %v685
  %v687 = vsub.f32 1.5, %v686
  %v688 = vmul.f32 %v683, %v687
  %vm689 = vweird.f32 %v672
  %vm690 = vweird.f32 %v683
  %vm691 = vmor %vm689, %vm690
  %v692 = vsel %vm691, %v683, %v688
  %v693 = vmul.f32 %v667, %v682
  %v694 = vmul.f32 %v668, %v682
  %v695 = vmul.f32 %v669, %v692
  %v696 = vmul.f32 %v670, %v692
  %v697 = vld [vmem:[%s3] sm:$0x1]
  %v698 = vld [vmem:[%s3 + $0x1] sm:$0x1]
  %v701 = vperm.slane %v697, 0
  %v702 = vperm.slane %v698, 0
  %v705 = vmul.f32 %v693, %v701
  %v706 = vmul.f32 %v694, %v701
  %v707 = vmul.f32 %v695, %v702
  %v708 = vmul.f32 %v696, %v702
  %v709 = vld [vmem:[%s4] sm:$0x1]
  %v710 = vld [vmem:[%s4 + $0x1] sm:$0x1]
  %v713 = vperm.slane %v709, 0
  %v714 = vperm.slane %v710, 0
  %v717 = vadd.f32 %v705, %v713
  %v718 = vadd.f32 %v706, %v713
  %v719 = vadd.f32 %v707, %v714
  %v720 = vadd.f32 %v708, %v714
  %v721 = vxor.u32 %v717, 2147483648
  %v722 = vxor.u32 %v718, 2147483648
  %v723 = vxor.u32 %v719, 2147483648
  %v724 = vxor.u32 %v720, 2147483648
  %v725 = vmul.f32 %v721, 1.442695
  %v726 = vpow.pop %v725
  %v727 = vmul.f32 %v722, 1.442695
  %v728 = vpow.pop %v727
  %v729 = vmul.f32 %v723, 1.442695
  %v730 = vpow.pop %v729
  %v731 = vmul.f32 %v724, 1.442695
  %v732 = vpow.pop %v731
  %v733 = vadd.f32 %v726, 1.0
  %v734 = vadd.f32 %v728, 1.0
  %v735 = vadd.f32 %v730, 1.0
  %v736 = vadd.f32 %v732, 1.0
  %v737 = vrcp.pop %v733
  %v738 = vmul.f32 %v733, %v737
  %v739 = vsub.f32 1.0, %v738
  %v740 = vmul.f32 %v737, %v739
  %v741 = vadd.f32 %v737, %v740
  %vm742 = vweird.f32 %v733
  %vm743 = vweird.f32 %v737
  %vm744 = vmor %vm742, %vm743
  %v745 = vsel %vm744, %v737, %v741
  %v746 = vand.u32 2147483647, %v733
  %vm747 = vcmp.eq.f32.partialorder %v746, 8.507059e+37
  %v748 = vand.u32 %v733, 2147483648
  %v749 = vor.u32 1.1754944e-38, %v748
  %v750 = vsel %vm747, %v749, %v745
  %v751 = vmul.f32 1.0, %v750
  %v752 = vrcp.pop %v734
  %v753 = vmul.f32 %v734, %v752
  %v754 = vsub.f32 1.0, %v753
  %v755 = vmul.f32 %v752, %v754
  %v756 = vadd.f32 %v752, %v755
  %vm757 = vweird.f32 %v734
  %vm758 = vweird.f32 %v752
  %vm759 = vmor %vm757, %vm758
  %v760 = vsel %vm759, %v752, %v756
  %v761 = vand.u32 2147483647, %v734
  %vm762 = vcmp.eq.f32.partialorder %v761, 8.507059e+37
  %v763 = vand.u32 %v734, 2147483648
  %v764 = vor.u32 1.1754944e-38, %v763
  %v765 = vsel %vm762, %v764, %v760
  %v766 = vmul.f32 1.0, %v765
  %v767 = vrcp.pop %v735
  %v768 = vmul.f32 %v735, %v767
  %v769 = vsub.f32 1.0, %v768
  %v770 = vmul.f32 %v767, %v769
  %v771 = vadd.f32 %v767, %v770
  %vm772 = vweird.f32 %v735
  %vm773 = vweird.f32 %v767
  %vm774 = vmor %vm772, %vm773
  %v775 = vsel %vm774, %v767, %v771
  %v776 = vand.u32 2147483647, %v735
  %vm777 = vcmp.eq.f32.partialorder %v776, 8.507059e+37
  %v778 = vand.u32 %v735, 2147483648
  %v779 = vor.u32 1.1754944e-38, %v778
  %v780 = vsel %vm777, %v779, %v775
  %v781 = vmul.f32 1.0, %v780
  %v782 = vrcp.pop %v736
  %v783 = vmul.f32 %v736, %v782
  %v784 = vsub.f32 1.0, %v783
  %v785 = vmul.f32 %v782, %v784
  %v786 = vadd.f32 %v782, %v785
  %vm787 = vweird.f32 %v736
  %vm788 = vweird.f32 %v782
  %vm789 = vmor %vm787, %vm788
  %v790 = vsel %vm789, %v782, %v786
  %v791 = vand.u32 2147483647, %v736
  %vm792 = vcmp.eq.f32.partialorder %v791, 8.507059e+37
  %v793 = vand.u32 %v736, 2147483648
  %v794 = vor.u32 1.1754944e-38, %v793
  %v795 = vsel %vm792, %v794, %v790
  %v796 = vmul.f32 1.0, %v795
  %v797 = vmul.f32 %v717, %v751
  %v798 = vmul.f32 %v718, %v766
  %v799 = vmul.f32 %v719, %v781
  %v800 = vmul.f32 %v720, %v796
  %v801 = vrot.slane %v797, 7
  %v802 = vrot.slane %v798, 7
  %v803 = vrot.slane %v799, 7
  %v804 = vrot.slane %v800, 7
  %v805 = vsel %vm377, %v803, %v804
  %v806 = vsel %vm377, %v802, %v803
  %v807 = vsel %vm377, %v801, %v802
  %v808 = vsel %vm377, %v804, %v801
  %v809 = vsel %vm386, 0.0, %v808
  %v810 = vsel %vm387, 0.0, %v807
  %v811 = vsel %vm388, 0.0, %v806
  %v812 = vsel %vm389, 0.0, %v805
  %v813 = vrot.slane %v797, 1
  %v814 = vrot.slane %v798, 1
  %v815 = vrot.slane %v799, 1
  %v816 = vrot.slane %v800, 1
  %v817 = vsel %vm398, %v815, %v816
  %v818 = vsel %vm398, %v814, %v815
  %v819 = vsel %vm398, %v813, %v814
  %v820 = vsel %vm398, %v816, %v813
  %v821 = vsel %vm407, 0.0, %v819
  %v822 = vsel %vm408, 0.0, %v818
  %v823 = vsel %vm409, 0.0, %v817
  %v824 = vsel %vm410, 0.0, %v820
  %v825 = vpack.c.bf16 %v810, %v809
  %v826 = vpack.c.bf16 %v798, %v797
  %v827 = vpack.c.bf16 %v822, %v821
  %v828 = vpack.c.bf16 %v812, %v811
  %v829 = vpack.c.bf16 %v800, %v799
  %v830 = vpack.c.bf16 %v824, %v823
  %v831 = vld [vmem:[%s9] sm:$0xf]
  %v832 = vld [vmem:[%s9 + $0x4] sm:$0xf]
  %v833 = vld [vmem:[%s9 + $0x8] sm:$0xf]
  %v834 = vld [vmem:[%s9 + $0xc] sm:$0xf]
  %v835 = vld [vmem:[%s9 + $0x10] sm:$0xf]
  %v836 = vld [vmem:[%s9 + $0x14] sm:$0xf]
  %v837 = vld [vmem:[%s9 + $0x18] sm:$0xf]
  %v838 = vld [vmem:[%s9 + $0x1c] sm:$0xf]
  %v839 = vld [vmem:[%s9 + $0x20] sm:$0xf]
  %v840 = vld [vmem:[%s9 + $0x24] sm:$0xf]
  %v841 = vld [vmem:[%s9 + $0x28] sm:$0xf]
  %v842 = vld [vmem:[%s9 + $0x2c] sm:$0xf]
  %v843 = vld [vmem:[%s9 + $0x30] sm:$0xf]
  %v844 = vld [vmem:[%s9 + $0x34] sm:$0xf]
  %v845 = vld [vmem:[%s9 + $0x38] sm:$0xf]
  %v846 = vld [vmem:[%s9 + $0x3c] sm:$0xf]
  %v847 = vld [vmem:[%s9 + $0x40] sm:$0xf]
  %v848 = vld [vmem:[%s9 + $0x44] sm:$0xf]
  %v849 = vld [vmem:[%s9 + $0x48] sm:$0xf]
  %v850 = vld [vmem:[%s9 + $0x4c] sm:$0xf]
  %v851 = vld [vmem:[%s9 + $0x50] sm:$0xf]
  %v852 = vld [vmem:[%s9 + $0x54] sm:$0xf]
  %v853 = vld [vmem:[%s9 + $0x58] sm:$0xf]
  %v854 = vld [vmem:[%s9 + $0x5c] sm:$0xf]
  %v855 = vld [vmem:[%s9 + $0x60] sm:$0xf]
  %v856 = vld [vmem:[%s9 + $0x64] sm:$0xf]
  %v857 = vld [vmem:[%s9 + $0x68] sm:$0xf]
  %v858 = vld [vmem:[%s9 + $0x6c] sm:$0xf]
  %v859 = vld [vmem:[%s9 + $0x70] sm:$0xf]
  %v860 = vld [vmem:[%s9 + $0x74] sm:$0xf]
  %v861 = vld [vmem:[%s9 + $0x78] sm:$0xf]
  %v862 = vld [vmem:[%s9 + $0x7c] sm:$0xf]
  %v863 = vld [vmem:[%s9 + $0x80] sm:$0xf]
  %v864 = vld [vmem:[%s9 + $0x84] sm:$0xf]
  %v865 = vld [vmem:[%s9 + $0x88] sm:$0xf]
  %v866 = vld [vmem:[%s9 + $0x8c] sm:$0xf]
  %v867 = vld [vmem:[%s9 + $0x90] sm:$0xf]
  %v868 = vld [vmem:[%s9 + $0x94] sm:$0xf]
  %v869 = vld [vmem:[%s9 + $0x98] sm:$0xf]
  %v870 = vld [vmem:[%s9 + $0x9c] sm:$0xf]
  %v871 = vld [vmem:[%s9 + $0xa0] sm:$0xf]
  %v872 = vld [vmem:[%s9 + $0xa4] sm:$0xf]
  %v873 = vld [vmem:[%s9 + $0xa8] sm:$0xf]
  %v874 = vld [vmem:[%s9 + $0xac] sm:$0xf]
  %v875 = vld [vmem:[%s9 + $0xb0] sm:$0xf]
  %v876 = vld [vmem:[%s9 + $0xb4] sm:$0xf]
  %v877 = vld [vmem:[%s9 + $0xb8] sm:$0xf]
  %v878 = vld [vmem:[%s9 + $0xbc] sm:$0xf]
  %v879 = vld [vmem:[%s10] sm:$0x1]
  %v881 = vperm.slane %v879, 0
  %v931 = vunpack.c.l.b16 %v831
  %v932 = vunpack.c.l.b16 %v832
  %v933 = vunpack.c.l.b16 %v833
  %v934 = vunpack.c.l.b16 %v834
  %v935 = vunpack.c.l.b16 %v835
  %v936 = vunpack.c.l.b16 %v836
  %v937 = vunpack.c.l.b16 %v837
  %v938 = vunpack.c.l.b16 %v838
  %v939 = vunpack.c.l.b16 %v839
  %v940 = vunpack.c.l.b16 %v840
  %v941 = vunpack.c.l.b16 %v841
  %v942 = vunpack.c.l.b16 %v842
  %v943 = vunpack.c.l.b16 %v843
  %v944 = vunpack.c.l.b16 %v844
  %v945 = vunpack.c.l.b16 %v845
  %v946 = vunpack.c.l.b16 %v846
  %v947 = vunpack.c.l.b16 %v847
  %v948 = vunpack.c.l.b16 %v848
  %v949 = vunpack.c.l.b16 %v849
  %v950 = vunpack.c.l.b16 %v850
  %v951 = vunpack.c.l.b16 %v851
  %v952 = vunpack.c.l.b16 %v852
  %v953 = vunpack.c.l.b16 %v853
  %v954 = vunpack.c.l.b16 %v854
  %v955 = vunpack.c.l.b16 %v855
  %v956 = vunpack.c.l.b16 %v856
  %v957 = vunpack.c.l.b16 %v857
  %v958 = vunpack.c.l.b16 %v858
  %v959 = vunpack.c.l.b16 %v859
  %v960 = vunpack.c.l.b16 %v860
  %v961 = vunpack.c.l.b16 %v861
  %v962 = vunpack.c.l.b16 %v862
  %v963 = vunpack.c.l.b16 %v863
  %v964 = vunpack.c.l.b16 %v864
  %v965 = vunpack.c.l.b16 %v865
  %v966 = vunpack.c.l.b16 %v866
  %v967 = vunpack.c.l.b16 %v867
  %v968 = vunpack.c.l.b16 %v868
  %v969 = vunpack.c.l.b16 %v869
  %v970 = vunpack.c.l.b16 %v870
  %v971 = vunpack.c.l.b16 %v871
  %v972 = vunpack.c.l.b16 %v872
  %v973 = vunpack.c.l.b16 %v873
  %v974 = vunpack.c.l.b16 %v874
  %v975 = vunpack.c.l.b16 %v875
  %v976 = vunpack.c.l.b16 %v876
  %v977 = vunpack.c.l.b16 %v877
  %v978 = vunpack.c.l.b16 %v878
  %v979 = vpack.c.b16 %v932, %v931
  %v980 = vpack.c.b16 %v934, %v933
  %v981 = vpack.c.b16 %v936, %v935
  %v982 = vpack.c.b16 %v938, %v937
  %v983 = vpack.c.b16 %v940, %v939
  %v984 = vpack.c.b16 %v942, %v941
  %v985 = vpack.c.b16 %v944, %v943
  %v986 = vpack.c.b16 %v946, %v945
  %v987 = vpack.c.b16 %v948, %v947
  %v988 = vpack.c.b16 %v950, %v949
  %v989 = vpack.c.b16 %v952, %v951
  %v990 = vpack.c.b16 %v954, %v953
  %v991 = vpack.c.b16 %v956, %v955
  %v992 = vpack.c.b16 %v958, %v957
  %v993 = vpack.c.b16 %v960, %v959
  %v994 = vpack.c.b16 %v962, %v961
  %v995 = vpack.c.b16 %v964, %v963
  %v996 = vpack.c.b16 %v966, %v965
  %v997 = vpack.c.b16 %v968, %v967
  %v998 = vpack.c.b16 %v970, %v969
  %v999 = vpack.c.b16 %v972, %v971
  %v1000 = vpack.c.b16 %v974, %v973
  %v1001 = vpack.c.b16 %v976, %v975
  %v1002 = vpack.c.b16 %v978, %v977
  %1027 = vmatpush.bf16.msra.mxu0 %v986
  %1028 = vmatpush.bf16.msra.mxu0 %v985
  %1029 = vmatpush.bf16.msra.mxu0 %v984
  %1030 = vmatpush.bf16.msra.mxu0 %v983
  %1031 = vmatpush.bf16.msra.mxu0 %v982
  %1032 = vmatpush.bf16.msra.mxu0 %v981
  %1033 = vmatpush.bf16.msra.mxu0 %v980
  %1034 = vmatpush.bf16.msra.mxu0 %v979
  %1035 = vmatmul.bf16.gmra.mxu0 %v825
  %v1036 = vpop.f32.mrf.mxu0
  %v1037 = vadd.f32 %v881, %v1036
  %v1038 = vpop.f32.mrf.mxu0
  %v1039 = vadd.f32 %v881, %v1038
  %1040 = vmatmul.bf16.gmra.mxu0 %v828
  %v1041 = vpop.f32.mrf.mxu0
  %v1042 = vadd.f32 %v881, %v1041
  %v1043 = vpop.f32.mrf.mxu0
  %v1044 = vadd.f32 %v881, %v1043
  %1045 = vdwg.mxu0
  %1046 = vmatpush.bf16.msra.mxu0 %v994
  %1047 = vmatpush.bf16.msra.mxu0 %v993
  %1048 = vmatpush.bf16.msra.mxu0 %v992
  %1049 = vmatpush.bf16.msra.mxu0 %v991
  %1050 = vmatpush.bf16.msra.mxu0 %v990
  %1051 = vmatpush.bf16.msra.mxu0 %v989
  %1052 = vmatpush.bf16.msra.mxu0 %v988
  %1053 = vmatpush.bf16.msra.mxu0 %v987
  %1054 = vmatmul.bf16.gmra.mxu0 %v826
  %v1055 = vpop.f32.mrf.mxu0
  %v1056 = vadd.f32 %v1037, %v1055
  %v1057 = vpop.f32.mrf.mxu0
  %v1058 = vadd.f32 %v1039, %v1057
  %1059 = vmatmul.bf16.gmra.mxu0 %v829
  %v1060 = vpop.f32.mrf.mxu0
  %v1061 = vadd.f32 %v1042, %v1060
  %v1062 = vpop.f32.mrf.mxu0
  %v1063 = vadd.f32 %v1044, %v1062
  %1064 = vdwg.mxu0
  %1065 = vmatpush.bf16.msra.mxu0 %v1002
  %1066 = vmatpush.bf16.msra.mxu0 %v1001
  %1067 = vmatpush.bf16.msra.mxu0 %v1000
  %1068 = vmatpush.bf16.msra.mxu0 %v999
  %1069 = vmatpush.bf16.msra.mxu0 %v998
  %1070 = vmatpush.bf16.msra.mxu0 %v997
  %1071 = vmatpush.bf16.msra.mxu0 %v996
  %1072 = vmatpush.bf16.msra.mxu0 %v995
  %1073 = vmatmul.bf16.gmra.mxu0 %v827
  %v1074 = vpop.f32.mrf.mxu0
  %v1075 = vadd.f32 %v1056, %v1074
  %v1076 = vpop.f32.mrf.mxu0
  %v1077 = vadd.f32 %v1058, %v1076
  %1078 = vmatmul.bf16.gmra.mxu0 %v830
  %v1079 = vpop.f32.mrf.mxu0
  %v1080 = vadd.f32 %v1061, %v1079
  %v1081 = vpop.f32.mrf.mxu0
  %v1082 = vadd.f32 %v1063, %v1081
  %1083 = vdwg.mxu0
  %v1084 = vadd.f32 %v1075, %v159
  %v1085 = vadd.f32 %v1077, %v161
  %v1086 = vadd.f32 %v1080, %v164
  %v1087 = vadd.f32 %v1082, %v166
  %1088 = vst [vmem:[%s11] sm:$0xff] %v1084
  %1089 = vst [vmem:[%s11 + $0x8] sm:$0xff] %v1085
  %1090 = vst [vmem:[%s11 + $0x10] sm:$0xff] %v1086
  %1091 = vst [vmem:[%s11 + $0x18] sm:$0xff] %v1087
  // Predicated region
  $region46: #{res_block_forward.1} parent=0 // pred_check
    _
  $region47: #{res_block_forward.1} parent=0 // pred_check_branch
    %1093 = sbr.rel (0) target = $region49
  $region48: #{res_block_forward.1} parent=0 // pred_region
    _
  $region49: #{res_block_forward.1} parent=0 // pred_fallthru
    _
  // Predicated region
  $region50: #{res_block_forward.1} parent=0 // pred_check
    _
  $region51: #{res_block_forward.1} parent=0 // pred_check_branch
    %1095 = sbr.rel (0) target = $region53
  $region52: #{res_block_forward.1} parent=0 // pred_region
    _
  $region53: #{res_block_forward.1} parent=0 // pred_fallthru
    _

</llo_original>
